<compile_context>
chip_gen: v5e
topology: v5e:2x2
jax: 0.10.0
libtpu: 0.0.40
codegen_flags: <defaults>
</compile_context>

<pallas_src>
import functools

import jax
import jax.numpy as jnp
from jax import lax
from jax.experimental import pallas as pl
from jax.experimental.pallas import tpu as pltpu


def _round_up(v, m):
    return (v + m - 1) // m * m


def _device_kind():
    try:
        return jax.devices()[0].device_kind.lower()
    except Exception:
        return ""


def _vmem_capacity_bytes():
    try:
        cap = int(pltpu.get_tpu_info().vmem_capacity_bytes)
        if cap > 0:
            return cap
    except Exception:
        pass
    return 64 * 1024 * 1024  # conservative fallback (v7x per-core VMEM)


def _pad2(a, shape, dtype):
    a = a.astype(dtype)
    if a.shape == shape:
        return a
    return jnp.zeros(shape, dtype).at[: a.shape[0], : a.shape[1]].set(a)


def residual_prenorm_ffn_kernel(x_ref, g_ref, bta_ref, w1_ref, b1_ref, w2_ref,
                                b2_ref, o_ref, *, d_real, eps, bf16_gelu):
    x = x_ref[...]                                               # (TM, Dp) f32
    # ---- PreNorm: LayerNorm over the real D columns (padded columns are zero) ----
    inv_d = 1.0 / d_real
    mean = jnp.sum(x, axis=-1, keepdims=True) * inv_d
    var = jnp.sum(x * x, axis=-1, keepdims=True) * inv_d - mean * mean
    xn = (x - mean) * lax.rsqrt(var + eps)
    xn = xn * g_ref[...] + bta_ref[...]          # padded cols -> 0 (gamma/beta pad = 0)
    # ---- FeedForward: gelu(xn @ W1 + b1) @ W2 + b2 (bf16 MXU, f32 accumulate) ----
    # TODO(synk): tanh-approx GELU used (repo's nn.GELU is erf); diff is negligible.
    h = jnp.dot(xn.astype(jnp.bfloat16), w1_ref[...],
                preferred_element_type=jnp.float32)              # (TM, Hp)
    h = h + b1_ref[...]
    if bf16_gelu:
        h = jax.nn.gelu(h.astype(jnp.bfloat16), approximate=True)
    else:
        h = jax.nn.gelu(h, approximate=True).astype(jnp.bfloat16)
    y = jnp.dot(h, w2_ref[...], preferred_element_type=jnp.float32)   # (TM, Dp)
    y = y + b2_ref[...]
    # ---- Residual: fn(x) + x (re-read x; avoids keeping f32 x live across matmuls) ----
    o_ref[...] = (y + x_ref[...]).astype(o_ref.dtype)


def residual_prenorm_ffn(x, gamma, beta, w1, b1, w2, b2, *, eps=1e-5, tm_max=None):
    B, N, D = x.shape
    H = w1.shape[1]
    M = B * N

    Dp = _round_up(D, 128)
    Hp = _round_up(H, 128)
    d_aligned = (Dp == D)

    phys_vmem = _vmem_capacity_bytes()
    if tm_max is None:
        tm_max = 1024 if phys_vmem >= 96 * 1024 * 1024 else 512

    # Row tiling: no M padding (Pallas masks the partial last row tile). Force >= 2
    # tiles whenever M allows so ("parallel",) shards across both v7x TensorCores.
    if M <= 2 * tm_max:
        TM = max(8, _round_up(pl.cdiv(M, 2), 8))
    else:
        TM = tm_max
    num_tiles = pl.cdiv(M, TM)

    # Activations: free reshape; column padding only when D is not lane-aligned.
    x2 = x.reshape(M, D).astype(jnp.float32)
    if not d_aligned:
        x2 = jnp.zeros((M, Dp), jnp.float32).at[:, :D].set(x2)

    # Parameters (weight-sized, cheap to pad). Zero padding keeps padded output
    # columns exactly zero: gamma/beta pads zero the padded LayerNorm columns and
    # padded W/b entries contribute nothing to the contractions.
    gp = _pad2(gamma.reshape(1, D), (1, Dp), jnp.float32)
    btp = _pad2(beta.reshape(1, D), (1, Dp), jnp.float32)
    w1p = _pad2(w1, (Dp, Hp), jnp.bfloat16)
    b1p = _pad2(b1.reshape(1, H), (1, Hp), jnp.float32)
    w2p = _pad2(w2, (Hp, Dp), jnp.bfloat16)
    b2p = _pad2(b2.reshape(1, D), (1, Dp), jnp.float32)

    # bf16 GELU only on chips with a bf16 VPU/EUP (v6e / v7x); f32 on v5e and older.
    kind = _device_kind()
    bf16_gelu = not any(v in kind for v in ("v2", "v3", "v4", "v5"))

    kernel = functools.partial(residual_prenorm_ffn_kernel,
                               d_real=float(D), eps=float(eps), bf16_gelu=bf16_gelu)

    # VMEM budget: double-buffered x/out tiles, single-buffered weights/biases,
    # per-tile f32 intermediates; clamp to 75% of physical VMEM (v7x-safe headroom).
    f32b, bf16b = 4, 2
    working_set = (
        2 * 2 * TM * Dp * f32b                  # x in + out, double-buffered
        + (Dp * Hp + Hp * Dp) * bf16b           # W1, W2 (bf16), single-buffered
        + (Hp + 3 * Dp) * f32b                  # b1, b2, gamma, beta
        + (TM * Hp + TM * Dp) * f32b            # intermediates h, y
    )
    vmem_limit = int(min(int(0.75 * phys_vmem),
                         max(16 * 1024 * 1024, 2 * working_set)))

    cost = pl.CostEstimate(
        flops=4 * M * Dp * Hp + 10 * M * Dp,         # two matmuls + LN/residual VPU work
        transcendentals=M * Hp + M,                  # tanh-GELU + rsqrt
        bytes_accessed=(2 * M * Dp * f32b            # x in + out
                        + (Dp * Hp + Hp * Dp) * bf16b
                        + (Hp + 3 * Dp) * f32b),
    )

    def make_call(single_buffer_weights):
        const_kw = (dict(pipeline_mode=pl.Buffered(1))
                    if single_buffer_weights else {})
        in_specs = [
            pl.BlockSpec((TM, Dp), lambda i: (i, 0)),               # x row tile
            pl.BlockSpec((1, Dp), lambda i: (0, 0), **const_kw),    # gamma
            pl.BlockSpec((1, Dp), lambda i: (0, 0), **const_kw),    # beta
            pl.BlockSpec((Dp, Hp), lambda i: (0, 0), **const_kw),   # W1 (VMEM-resident)
            pl.BlockSpec((1, Hp), lambda i: (0, 0), **const_kw),    # b1
            pl.BlockSpec((Hp, Dp), lambda i: (0, 0), **const_kw),   # W2 (VMEM-resident)
            pl.BlockSpec((1, Dp), lambda i: (0, 0), **const_kw),    # b2
        ]
        return pl.pallas_call(
            kernel,
            out_shape=jax.ShapeDtypeStruct((M, Dp), x.dtype),
            grid=(num_tiles,),
            in_specs=in_specs,
            out_specs=pl.BlockSpec((TM, Dp), lambda i: (i, 0)),
            compiler_params=pltpu.CompilerParams(
                dimension_semantics=("parallel",),
                vmem_limit_bytes=vmem_limit,
            ),
            cost_estimate=cost,
        )

    args = (x2, gp, btp, w1p, b1p, w2p, b2p)
    try:
        out = make_call(True)(*args)
    except Exception:
        # Fallback if single-buffered constant operands (pl.Buffered(1)) are rejected
        # by this jax/Mosaic version: default double-buffered weight specs.
        out = make_call(False)(*args)

    if d_aligned:
        return out.reshape(B, N, D)
    return out[:, :D].reshape(B, N, D)


def residual_prenorm_ffn_ref(x, gamma, beta, w1, b1, w2, b2, eps=1e-5):
    mu = jnp.mean(x, axis=-1, keepdims=True)
    var = jnp.mean(jnp.square(x - mu), axis=-1, keepdims=True)
    xn = (x - mu) * lax.rsqrt(var + eps) * gamma + beta
    h = jax.nn.gelu(jnp.einsum("bnd,dh->bnh", xn, w1) + b1, approximate=True)
    y = jnp.einsum("bnh,hd->bnd", h, w2) + b2
    return y + x


if __name__ == "__main__":
    # TODO(synk): FeedForward's nn.Dropout is omitted (inference no-op, not fused).
    B, N, D, H = 2, 8, 32, 64
    key = jax.random.PRNGKey(0)
    kx, kg, kb, k1, k2, k3, k4 = jax.random.split(key, 7)

    x = jax.random.normal(kx, (B, N, D), dtype=jnp.float32)
    gamma = 1.0 + 0.1 * jax.random.normal(kg, (D,), dtype=jnp.float32)
    beta = 0.01 * jax.random.normal(kb, (D,), dtype=jnp.float32)
    w1 = jax.random.normal(k1, (D, H), dtype=jnp.float32) * 0.05
    b1 = jax.random.normal(k2, (H,), dtype=jnp.float32) * 0.01
    w2 = jax.random.normal(k3, (H, D), dtype=jnp.float32) * 0.05
    b2 = jax.random.normal(k4, (D,), dtype=jnp.float32) * 0.01

    out = residual_prenorm_ffn(x, gamma, beta, w1, b1, w2, b2)
    jax.block_until_ready(out)

    ref = residual_prenorm_ffn_ref(x, gamma, beta, w1, b1, w2, b2)
    # bf16 MXU inputs / bf16 GELU (f32 accumulate, f32 residual) vs f32 reference.
    assert jnp.allclose(out, ref, atol=3e-2, rtol=3e-2), "mismatch vs reference"

    print("KERNEL_OK")
</pallas_src>

<mosaic_0001>
module attributes {stable_mosaic.version = 11 : i64} {
  func.func @residual_prenorm_ffn_kernel(%arg0: i32, %arg1: memref<8x128xf32, #tpu.memory_space<vmem>>, %arg2: memref<1x128xf32, #tpu.memory_space<vmem>>, %arg3: memref<1x128xf32, #tpu.memory_space<vmem>>, %arg4: memref<128x128xbf16, #tpu.memory_space<vmem>>, %arg5: memref<1x128xf32, #tpu.memory_space<vmem>>, %arg6: memref<128x128xbf16, #tpu.memory_space<vmem>>, %arg7: memref<1x128xf32, #tpu.memory_space<vmem>>, %arg8: memref<8x128xf32, #tpu.memory_space<vmem>>) attributes {dimension_semantics = [#tpu.dimension_semantics<parallel>], iteration_bounds = array<i64: 2>, scalar_prefetch = 0 : i64, scratch_operands = 0 : i64, tpu.core_type = #tpu.core_type<tc>, window_params = [{transform_indices = @transform_0, window_bounds = array<i64: 8, 128>}, {pipeline_mode = #tpu.pipeline_mode<synchronous>, transform_indices = @transform_1, window_bounds = array<i64: 1, 128>}, {pipeline_mode = #tpu.pipeline_mode<synchronous>, transform_indices = @transform_2, window_bounds = array<i64: 1, 128>}, {pipeline_mode = #tpu.pipeline_mode<synchronous>, transform_indices = @transform_3, window_bounds = array<i64: 128, 128>}, {pipeline_mode = #tpu.pipeline_mode<synchronous>, transform_indices = @transform_4, window_bounds = array<i64: 1, 128>}, {pipeline_mode = #tpu.pipeline_mode<synchronous>, transform_indices = @transform_5, window_bounds = array<i64: 128, 128>}, {pipeline_mode = #tpu.pipeline_mode<synchronous>, transform_indices = @transform_6, window_bounds = array<i64: 1, 128>}, {transform_indices = @transform_7, window_bounds = array<i64: 8, 128>}]} {
    %c0 = arith.constant 0 : index
    %c0_0 = arith.constant 0 : index
    %0 = vector.load %arg1[%c0, %c0_0] : memref<8x128xf32, #tpu.memory_space<vmem>>, vector<8x128xf32>
    %cst = arith.constant dense<0.000000e+00> : vector<8xf32>
    %1 = vector.multi_reduction <add>, %0, %cst [1] : vector<8x128xf32> to vector<8xf32>
    %2 = vector.shape_cast %1 : vector<8xf32> to vector<8x1xf32>
    %cst_1 = arith.constant 3.125000e-02 : f32
    %3 = vector.broadcast %cst_1 : f32 to vector<8x1xf32>
    %4 = arith.mulf %2, %3 : vector<8x1xf32>
    %5 = arith.mulf %0, %0 : vector<8x128xf32>
    %cst_2 = arith.constant dense<0.000000e+00> : vector<8xf32>
    %6 = vector.multi_reduction <add>, %5, %cst_2 [1] : vector<8x128xf32> to vector<8xf32>
    %7 = vector.shape_cast %6 : vector<8xf32> to vector<8x1xf32>
    %cst_3 = arith.constant 3.125000e-02 : f32
    %8 = vector.broadcast %cst_3 : f32 to vector<8x1xf32>
    %9 = arith.mulf %7, %8 : vector<8x1xf32>
    %10 = arith.mulf %4, %4 : vector<8x1xf32>
    %11 = arith.subf %9, %10 : vector<8x1xf32>
    %12 = vector.broadcast %4 : vector<8x1xf32> to vector<8x128xf32>
    %13 = arith.subf %0, %12 : vector<8x128xf32>
    %cst_4 = arith.constant 9.99999974E-6 : f32
    %14 = vector.broadcast %cst_4 : f32 to vector<8x1xf32>
    %15 = arith.addf %11, %14 : vector<8x1xf32>
    %16 = math.rsqrt %15 : vector<8x1xf32>
    %17 = vector.broadcast %16 : vector<8x1xf32> to vector<8x128xf32>
    %18 = arith.mulf %13, %17 : vector<8x128xf32>
    %c0_5 = arith.constant 0 : index
    %c0_6 = arith.constant 0 : index
    %19 = vector.load %arg2[%c0_5, %c0_6] : memref<1x128xf32, #tpu.memory_space<vmem>>, vector<1x128xf32>
    %20 = vector.broadcast %19 : vector<1x128xf32> to vector<8x128xf32>
    %21 = arith.mulf %18, %20 : vector<8x128xf32>
    %c0_7 = arith.constant 0 : index
    %c0_8 = arith.constant 0 : index
    %22 = vector.load %arg3[%c0_7, %c0_8] : memref<1x128xf32, #tpu.memory_space<vmem>>, vector<1x128xf32>
    %23 = vector.broadcast %22 : vector<1x128xf32> to vector<8x128xf32>
    %24 = arith.addf %21, %23 : vector<8x128xf32>
    %25 = arith.truncf %24 : vector<8x128xf32> to vector<8x128xbf16>
    %c0_9 = arith.constant 0 : index
    %c0_10 = arith.constant 0 : index
    %26 = vector.load %arg4[%c0_9, %c0_10] : memref<128x128xbf16, #tpu.memory_space<vmem>>, vector<128x128xbf16>
    %cst_11 = arith.constant dense<0.000000e+00> : vector<8x128xf32>
    %27 = tpu.matmul %25, %26, %cst_11 {dimension_numbers = #tpu.dot_dimension_numbers<[1], [0], [0], [1], [0, 0, 1, 1], [], []>} : vector<8x128xbf16>, vector<128x128xbf16>, vector<8x128xf32> -> vector<8x128xf32>
    %c0_12 = arith.constant 0 : index
    %c0_13 = arith.constant 0 : index
    %28 = vector.load %arg5[%c0_12, %c0_13] : memref<1x128xf32, #tpu.memory_space<vmem>>, vector<1x128xf32>
    %29 = vector.broadcast %28 : vector<1x128xf32> to vector<8x128xf32>
    %30 = arith.addf %27, %29 : vector<8x128xf32>
    %31 = arith.truncf %30 : vector<8x128xf32> to vector<8x128xbf16>
    %32 = arith.mulf %31, %31 : vector<8x128xbf16>
    %33 = arith.mulf %31, %32 : vector<8x128xbf16>
    %cst_14 = arith.constant 4.467770e-02 : bf16
    %34 = vector.broadcast %cst_14 : bf16 to vector<8x128xbf16>
    %35 = arith.mulf %34, %33 : vector<8x128xbf16>
    %36 = arith.addf %31, %35 : vector<8x128xbf16>
    %cst_15 = arith.constant 7.968750e-01 : bf16
    %37 = vector.broadcast %cst_15 : bf16 to vector<8x128xbf16>
    %38 = arith.mulf %37, %36 : vector<8x128xbf16>
    %39 = math.tanh %38 : vector<8x128xbf16>
    %cst_16 = arith.constant 1.000000e+00 : bf16
    %40 = vector.broadcast %cst_16 : bf16 to vector<8x128xbf16>
    %41 = arith.addf %40, %39 : vector<8x128xbf16>
    %cst_17 = arith.constant 5.000000e-01 : bf16
    %42 = vector.broadcast %cst_17 : bf16 to vector<8x128xbf16>
    %43 = arith.mulf %42, %41 : vector<8x128xbf16>
    %44 = arith.mulf %31, %43 : vector<8x128xbf16>
    %c0_18 = arith.constant 0 : index
    %c0_19 = arith.constant 0 : index
    %45 = vector.load %arg6[%c0_18, %c0_19] : memref<128x128xbf16, #tpu.memory_space<vmem>>, vector<128x128xbf16>
    %cst_20 = arith.constant dense<0.000000e+00> : vector<8x128xf32>
    %46 = tpu.matmul %44, %45, %cst_20 {dimension_numbers = #tpu.dot_dimension_numbers<[1], [0], [0], [1], [0, 0, 1, 1], [], []>} : vector<8x128xbf16>, vector<128x128xbf16>, vector<8x128xf32> -> vector<8x128xf32>
    %c0_21 = arith.constant 0 : index
    %c0_22 = arith.constant 0 : index
    %47 = vector.load %arg7[%c0_21, %c0_22] : memref<1x128xf32, #tpu.memory_space<vmem>>, vector<1x128xf32>
    %48 = vector.broadcast %47 : vector<1x128xf32> to vector<8x128xf32>
    %49 = arith.addf %46, %48 : vector<8x128xf32>
    %c0_23 = arith.constant 0 : index
    %c0_24 = arith.constant 0 : index
    %50 = vector.load %arg1[%c0_23, %c0_24] : memref<8x128xf32, #tpu.memory_space<vmem>>, vector<8x128xf32>
    %51 = arith.addf %49, %50 : vector<8x128xf32>
    %c0_25 = arith.constant 0 : index
    %c0_26 = arith.constant 0 : index
    %52 = vector.load %arg8[%c0_25, %c0_26] : memref<8x128xf32, #tpu.memory_space<vmem>>, vector<8x128xf32>
    tpu.vector_store %arg8[%c0_25, %c0_26], %51 {strides = array<i32>} : memref<8x128xf32, #tpu.memory_space<vmem>>, vector<8x128xf32>,
    return
  }
  func.func @transform_0(%arg0: i32) -> (i32, i32) {
    %c0_i32 = arith.constant 0 : i32
    %c0_i32_0 = arith.constant 0 : i32
    return %arg0, %c0_i32 : i32, i32
  }
  func.func @transform_1(%arg0: i32) -> (i32, i32) {
    %c0_i32 = arith.constant 0 : i32
    %c0_i32_0 = arith.constant 0 : i32
    %c0_i32_1 = arith.constant 0 : i32
    return %c0_i32, %c0_i32_0 : i32, i32
  }
  func.func @transform_2(%arg0: i32) -> (i32, i32) {
    %c0_i32 = arith.constant 0 : i32
    %c0_i32_0 = arith.constant 0 : i32
    %c0_i32_1 = arith.constant 0 : i32
    return %c0_i32, %c0_i32_0 : i32, i32
  }
  func.func @transform_3(%arg0: i32) -> (i32, i32) {
    %c0_i32 = arith.constant 0 : i32
    %c0_i32_0 = arith.constant 0 : i32
    %c0_i32_1 = arith.constant 0 : i32
    return %c0_i32, %c0_i32_0 : i32, i32
  }
  func.func @transform_4(%arg0: i32) -> (i32, i32) {
    %c0_i32 = arith.constant 0 : i32
    %c0_i32_0 = arith.constant 0 : i32
    %c0_i32_1 = arith.constant 0 : i32
    return %c0_i32, %c0_i32_0 : i32, i32
  }
  func.func @transform_5(%arg0: i32) -> (i32, i32) {
    %c0_i32 = arith.constant 0 : i32
    %c0_i32_0 = arith.constant 0 : i32
    %c0_i32_1 = arith.constant 0 : i32
    return %c0_i32, %c0_i32_0 : i32, i32
  }
  func.func @transform_6(%arg0: i32) -> (i32, i32) {
    %c0_i32 = arith.constant 0 : i32
    %c0_i32_0 = arith.constant 0 : i32
    %c0_i32_1 = arith.constant 0 : i32
    return %c0_i32, %c0_i32_0 : i32, i32
  }
  func.func @transform_7(%arg0: i32) -> (i32, i32) {
    %c0_i32 = arith.constant 0 : i32
    %c0_i32_0 = arith.constant 0 : i32
    return %arg0, %c0_i32 : i32, i32
  }
}

module attributes {stable_mosaic.version = 11 : i64} {
  func.func @residual_prenorm_ffn_kernel(%arg0: i32, %arg1: memref<8x128xf32, #tpu.memory_space<vmem>>, %arg2: memref<1x128xf32, #tpu.memory_space<vmem>>, %arg3: memref<1x128xf32, #tpu.memory_space<vmem>>, %arg4: memref<128x128xbf16, #tpu.memory_space<vmem>>, %arg5: memref<1x128xf32, #tpu.memory_space<vmem>>, %arg6: memref<128x128xbf16, #tpu.memory_space<vmem>>, %arg7: memref<1x128xf32, #tpu.memory_space<vmem>>, %arg8: memref<8x128xf32, #tpu.memory_space<vmem>>) attributes {dimension_semantics = [#tpu.dimension_semantics<parallel>], iteration_bounds = array<i64: 2>, scalar_prefetch = 0 : i64, scratch_operands = 0 : i64, tpu.core_type = #tpu.core_type<tc>, window_params = [{transform_indices = @transform_0, window_bounds = array<i64: 8, 128>}, {pipeline_mode = #tpu.pipeline_mode<synchronous>, transform_indices = @transform_1, window_bounds = array<i64: 1, 128>}, {pipeline_mode = #tpu.pipeline_mode<synchronous>, transform_indices = @transform_2, window_bounds = array<i64: 1, 128>}, {pipeline_mode = #tpu.pipeline_mode<synchronous>, transform_indices = @transform_3, window_bounds = array<i64: 128, 128>}, {pipeline_mode = #tpu.pipeline_mode<synchronous>, transform_indices = @transform_4, window_bounds = array<i64: 1, 128>}, {pipeline_mode = #tpu.pipeline_mode<synchronous>, transform_indices = @transform_5, window_bounds = array<i64: 128, 128>}, {pipeline_mode = #tpu.pipeline_mode<synchronous>, transform_indices = @transform_6, window_bounds = array<i64: 1, 128>}, {transform_indices = @transform_7, window_bounds = array<i64: 8, 128>}]} {
    %c0 = arith.constant 0 : index
    %c0_0 = arith.constant 0 : index
    %0 = vector.load %arg1[%c0, %c0_0] : memref<8x128xf32, #tpu.memory_space<vmem>>, vector<8x128xf32>
    %cst = arith.constant dense<0.000000e+00> : vector<8xf32>
    %1 = vector.multi_reduction <add>, %0, %cst [1] : vector<8x128xf32> to vector<8xf32>
    %2 = vector.shape_cast %1 : vector<8xf32> to vector<8x1xf32>
    %cst_1 = arith.constant 3.125000e-02 : f32
    %3 = vector.broadcast %cst_1 : f32 to vector<8x1xf32>
    %4 = arith.mulf %2, %3 : vector<8x1xf32>
    %5 = arith.mulf %0, %0 : vector<8x128xf32>
    %cst_2 = arith.constant dense<0.000000e+00> : vector<8xf32>
    %6 = vector.multi_reduction <add>, %5, %cst_2 [1] : vector<8x128xf32> to vector<8xf32>
    %7 = vector.shape_cast %6 : vector<8xf32> to vector<8x1xf32>
    %cst_3 = arith.constant 3.125000e-02 : f32
    %8 = vector.broadcast %cst_3 : f32 to vector<8x1xf32>
    %9 = arith.mulf %7, %8 : vector<8x1xf32>
    %10 = arith.mulf %4, %4 : vector<8x1xf32>
    %11 = arith.subf %9, %10 : vector<8x1xf32>
    %12 = vector.broadcast %4 : vector<8x1xf32> to vector<8x128xf32>
    %13 = arith.subf %0, %12 : vector<8x128xf32>
    %cst_4 = arith.constant 9.99999974E-6 : f32
    %14 = vector.broadcast %cst_4 : f32 to vector<8x1xf32>
    %15 = arith.addf %11, %14 : vector<8x1xf32>
    %16 = math.rsqrt %15 : vector<8x1xf32>
    %17 = vector.broadcast %16 : vector<8x1xf32> to vector<8x128xf32>
    %18 = arith.mulf %13, %17 : vector<8x128xf32>
    %c0_5 = arith.constant 0 : index
    %c0_6 = arith.constant 0 : index
    %19 = vector.load %arg2[%c0_5, %c0_6] : memref<1x128xf32, #tpu.memory_space<vmem>>, vector<1x128xf32>
    %20 = vector.broadcast %19 : vector<1x128xf32> to vector<8x128xf32>
    %21 = arith.mulf %18, %20 : vector<8x128xf32>
    %c0_7 = arith.constant 0 : index
    %c0_8 = arith.constant 0 : index
    %22 = vector.load %arg3[%c0_7, %c0_8] : memref<1x128xf32, #tpu.memory_space<vmem>>, vector<1x128xf32>
    %23 = vector.broadcast %22 : vector<1x128xf32> to vector<8x128xf32>
    %24 = arith.addf %21, %23 : vector<8x128xf32>
    %25 = arith.truncf %24 : vector<8x128xf32> to vector<8x128xbf16>
    %c0_9 = arith.constant 0 : index
    %c0_10 = arith.constant 0 : index
    %26 = vector.load %arg4[%c0_9, %c0_10] : memref<128x128xbf16, #tpu.memory_space<vmem>>, vector<128x128xbf16>
    %cst_11 = arith.constant dense<0.000000e+00> : vector<8x128xf32>
    %27 = tpu.matmul %25, %26, %cst_11 {dimension_numbers = #tpu.dot_dimension_numbers<[1], [0], [0], [1], [0, 0, 1, 1], [], []>} : vector<8x128xbf16>, vector<128x128xbf16>, vector<8x128xf32> -> vector<8x128xf32>
    %c0_12 = arith.constant 0 : index
    %c0_13 = arith.constant 0 : index
    %28 = vector.load %arg5[%c0_12, %c0_13] : memref<1x128xf32, #tpu.memory_space<vmem>>, vector<1x128xf32>
    %29 = vector.broadcast %28 : vector<1x128xf32> to vector<8x128xf32>
    %30 = arith.addf %27, %29 : vector<8x128xf32>
    %31 = arith.truncf %30 : vector<8x128xf32> to vector<8x128xbf16>
    %32 = arith.mulf %31, %31 : vector<8x128xbf16>
    %33 = arith.mulf %31, %32 : vector<8x128xbf16>
    %cst_14 = arith.constant 4.467770e-02 : bf16
    %34 = vector.broadcast %cst_14 : bf16 to vector<8x128xbf16>
    %35 = arith.mulf %34, %33 : vector<8x128xbf16>
    %36 = arith.addf %31, %35 : vector<8x128xbf16>
    %cst_15 = arith.constant 7.968750e-01 : bf16
    %37 = vector.broadcast %cst_15 : bf16 to vector<8x128xbf16>
    %38 = arith.mulf %37, %36 : vector<8x128xbf16>
    %39 = math.tanh %38 : vector<8x128xbf16>
    %cst_16 = arith.constant 1.000000e+00 : bf16
    %40 = vector.broadcast %cst_16 : bf16 to vector<8x128xbf16>
    %41 = arith.addf %40, %39 : vector<8x128xbf16>
    %cst_17 = arith.constant 5.000000e-01 : bf16
    %42 = vector.broadcast %cst_17 : bf16 to vector<8x128xbf16>
    %43 = arith.mulf %42, %41 : vector<8x128xbf16>
    %44 = arith.mulf %31, %43 : vector<8x128xbf16>
    %c0_18 = arith.constant 0 : index
    %c0_19 = arith.constant 0 : index
    %45 = vector.load %arg6[%c0_18, %c0_19] : memref<128x128xbf16, #tpu.memory_space<vmem>>, vector<128x128xbf16>
    %cst_20 = arith.constant dense<0.000000e+00> : vector<8x128xf32>
    %46 = tpu.matmul %44, %45, %cst_20 {dimension_numbers = #tpu.dot_dimension_numbers<[1], [0], [0], [1], [0, 0, 1, 1], [], []>} : vector<8x128xbf16>, vector<128x128xbf16>, vector<8x128xf32> -> vector<8x128xf32>
    %c0_21 = arith.constant 0 : index
    %c0_22 = arith.constant 0 : index
    %47 = vector.load %arg7[%c0_21, %c0_22] : memref<1x128xf32, #tpu.memory_space<vmem>>, vector<1x128xf32>
    %48 = vector.broadcast %47 : vector<1x128xf32> to vector<8x128xf32>
    %49 = arith.addf %46, %48 : vector<8x128xf32>
    %c0_23 = arith.constant 0 : index
    %c0_24 = arith.constant 0 : index
    %50 = vector.load %arg1[%c0_23, %c0_24] : memref<8x128xf32, #tpu.memory_space<vmem>>, vector<8x128xf32>
    %51 = arith.addf %49, %50 : vector<8x128xf32>
    %c0_25 = arith.constant 0 : index
    %c0_26 = arith.constant 0 : index
    %52 = vector.load %arg8[%c0_25, %c0_26] : memref<8x128xf32, #tpu.memory_space<vmem>>, vector<8x128xf32>
    tpu.vector_store %arg8[%c0_25, %c0_26], %51 {strides = array<i32>} : memref<8x128xf32, #tpu.memory_space<vmem>>, vector<8x128xf32>,
    return
  }
  func.func @transform_0(%arg0: i32) -> (i32, i32) {
    %c0_i32 = arith.constant 0 : i32
    %c0_i32_0 = arith.constant 0 : i32
    return %arg0, %c0_i32 : i32, i32
  }
  func.func @transform_1(%arg0: i32) -> (i32, i32) {
    %c0_i32 = arith.constant 0 : i32
    %c0_i32_0 = arith.constant 0 : i32
    %c0_i32_1 = arith.constant 0 : i32
    return %c0_i32, %c0_i32_0 : i32, i32
  }
  func.func @transform_2(%arg0: i32) -> (i32, i32) {
    %c0_i32 = arith.constant 0 : i32
    %c0_i32_0 = arith.constant 0 : i32
    %c0_i32_1 = arith.constant 0 : i32
    return %c0_i32, %c0_i32_0 : i32, i32
  }
  func.func @transform_3(%arg0: i32) -> (i32, i32) {
    %c0_i32 = arith.constant 0 : i32
    %c0_i32_0 = arith.constant 0 : i32
    %c0_i32_1 = arith.constant 0 : i32
    return %c0_i32, %c0_i32_0 : i32, i32
  }
  func.func @transform_4(%arg0: i32) -> (i32, i32) {
    %c0_i32 = arith.constant 0 : i32
    %c0_i32_0 = arith.constant 0 : i32
    %c0_i32_1 = arith.constant 0 : i32
    return %c0_i32, %c0_i32_0 : i32, i32
  }
  func.func @transform_5(%arg0: i32) -> (i32, i32) {
    %c0_i32 = arith.constant 0 : i32
    %c0_i32_0 = arith.constant 0 : i32
    %c0_i32_1 = arith.constant 0 : i32
    return %c0_i32, %c0_i32_0 : i32, i32
  }
  func.func @transform_6(%arg0: i32) -> (i32, i32) {
    %c0_i32 = arith.constant 0 : i32
    %c0_i32_0 = arith.constant 0 : i32
    %c0_i32_1 = arith.constant 0 : i32
    return %c0_i32, %c0_i32_0 : i32, i32
  }
  func.func @transform_7(%arg0: i32) -> (i32, i32) {
    %c0_i32 = arith.constant 0 : i32
    %c0_i32_0 = arith.constant 0 : i32
    return %arg0, %c0_i32 : i32, i32
  }
}

</mosaic_0001>

<llo_original>
// kernel: tpu_custom_call.1
$region0: #{tpu_custom_call.1}
  #allocation0 [shape = 'u32[]', space=smem, size = 0x4, offset = 0x4, fixed_abs, tag = 'smem constant byte address 0x4 - core index']
  #allocation1 [shape = 'u32[72,128]{1,0:T(1,128)}', space=vmem, size = 0x9000, scoped, tag = 'internal scratch']
  %s0 = inlined_call_operand.hbm [shape: f32[16,128], index: 0, kind: input, shape index: {}]
  %s1 = inlined_call_operand.hbm [shape: f32[1,128], index: 1, kind: input, shape index: {}]
  %s2 = inlined_call_operand.vmem [shape: f32[1,128], index: 2, kind: input, shape index: {}]
  %s3 = inlined_call_operand.hbm [shape: bf16[128,128], index: 3, kind: input, shape index: {}]
  %s4 = inlined_call_operand.vmem [shape: f32[1,128], index: 4, kind: input, shape index: {}]
  %s5 = inlined_call_operand.hbm [shape: bf16[128,128], index: 5, kind: input, shape index: {}]
  %s6 = inlined_call_operand.vmem [shape: f32[1,128], index: 6, kind: input, shape index: {}]
  %s7 = inlined_call_operand.hbm [shape: f32[16,128], index: 7, kind: output, shape index: {}]
  %s8 = sld [smem:[#allocation0]]
  $region77: #{tpu_custom_call.1} parent=0
    _
  %s10 = ssub.s32 1, %s8
  %s11 = scalar_select 0, %s10, %s8
  $region1: #{tpu_custom_call.1} parent=0
    #allocation2 [shape = 'u8[8192]{0}', space=vmem, size = 0x2000, scoped, tag = 'input window, operand 0']
    #allocation3 [shape = 's32[2]{0}', space=sflag, size = 0x8, scoped, tag = 'scoped memory for tpu_custom_call.1']
    #allocation4 [shape = 's32[2]{0}', space=sflag, size = 0x8, scoped, tag = 'scoped memory for tpu_custom_call.1']
    #allocation5 [shape = 'u8[512]{0}', space=vmem, size = 0x400, scoped, tag = 'input window, operand 1, single buffered']
    #allocation6 [shape = 's32[1]{0}', space=sflag, size = 0x4, scoped, tag = 'scoped memory for tpu_custom_call.1']
    #allocation7 [shape = 'u8[32768]{0}', space=vmem, size = 0x8000, scoped, tag = 'input window, operand 3, single buffered']
    #allocation8 [shape = 'u8[32768]{0}', space=vmem, size = 0x8000, scoped, tag = 'input window, operand 5, single buffered']
    #allocation9 [shape = 's32[1]{0}', space=sflag, size = 0x4, scoped, tag = 'scoped memory for tpu_custom_call.1']
    #allocation10 [shape = 'u8[8192]{0}', space=vmem, size = 0x2000, scoped, tag = 'output window, operand 0']
    %12 = vsyncpa [#allocation3], 0
    %s13 = scalar_lea.sflag [#allocation3], 1
    %14 = vsyncpa %s13, 0
    %15 = vsyncpa [#allocation6], 0
    %16 = vsyncpa [#allocation9], 0
    %17 = vsyncpa [#allocation4], 0
    %s18 = scalar_lea.sflag [#allocation4], 1
    %19 = vsyncpa %s18, 0
    loop: start=0, step=1, limit=4
    $region2: #{tpu_custom_call.1} parent=1 // loop_pre_header
      _
    $region3: #{tpu_custom_call.1} parent=1 // loop_header
      %s21 = sphi 0, %s25
      %p22 = scmp.ge.s32.totalorder %s21, 4
      %s31 = sphi 0, %s33
      %s34 = sphi 0, %s31
      %s35 = sphi 0, %s34
      %s51 = sphi 0, %s35
      %s55 = sphi 0, %s55
      %s57 = sphi 0, %s55
      %s58 = sphi 0, %s57
      %s72 = sphi 0, %s58
      %s76 = sphi 0, %s76
      %s78 = sphi 0, %s76
      %s79 = sphi 0, %s78
      %s93 = sphi 0, %s79
      %s97 = sphi 0, %s97
      %s99 = sphi 0, %s97
      %s100 = sphi 0, %s99
      %s114 = sphi 0, %s100
      %s118 = sphi 0, %s118
      %s120 = sphi 0, %s118
      %s121 = sphi 0, %s120
      %s135 = sphi 0, %s121
      %s139 = sphi 0, %s139
      %s141 = sphi 0, %s139
      %s142 = sphi 0, %s141
      %s156 = sphi 0, %s142
      %s160 = sphi 0, %s160
      %s162 = sphi 0, %s160
      %s163 = sphi 0, %s162
      %s177 = sphi 0, %s163
      %s183 = sphi 0, %s185
      %s186 = sphi 0, %s183
      %s187 = sphi 0, %s186
      %s203 = sphi 0, %s187
    $region4: #{tpu_custom_call.1} parent=1 // loop_header_branch
      %24 = sbr.rel (%p22) target = $region8
    $region5: #{tpu_custom_call.1} parent=1 // loop_body
      %s26 = ssub.s32 %s21, 1
      %s27 = ssub.s32 %s21, 2
      %s28 = sadd.s32 %s21, 1
      %s29 = ssub.s32 %s21, %s28
      %p30 = scmp.eq.s32.totalorder %s29, 0
      %s32 = sadd.s32 %s31, 1
      %s33 = scalar_select %p30, %s31, %s32
      %p36 = pneg %p30
      %p37 = scmp.eq.s32.totalorder %s21, 1
      %p38 = por %p36, %p37
      %p39 = scmp.ne.s32.totalorder %s31, %s34
      %p40 = scmp.eq.s32.totalorder %s21, 0
      %p41 = por %p39, %p40
      %p42 = scmp.ne.s32.totalorder %s31, %s34
      %p43 = scmp.eq.s32.totalorder %s26, 1
      %p44 = por %p42, %p43
      %p45 = scmp.ne.s32.totalorder %s34, %s35
      %p46 = scmp.eq.s32.totalorder %s26, 0
      %p47 = por %p45, %p46
      %p48 = scmp.ne.s32.totalorder %s34, %s35
      %p49 = scmp.eq.s32.totalorder %s27, 1
      %p50 = por %p48, %p49
      %p52 = scmp.ne.s32.totalorder %s35, %s51
      %p53 = scmp.eq.s32.totalorder %s27, 0
      %p54 = por %p52, %p53
      %s56 = sadd.s32 %s55, 1
      %p59 = scmp.eq.s32.totalorder %s21, 1
      %p60 = scmp.ne.s32.totalorder %s55, %s57
      %p61 = scmp.eq.s32.totalorder %s21, 0
      %p62 = por %p60, %p61
      %p63 = scmp.ne.s32.totalorder %s55, %s57
      %p64 = scmp.eq.s32.totalorder %s26, 1
      %p65 = por %p63, %p64
      %p66 = scmp.ne.s32.totalorder %s57, %s58
      %p67 = scmp.eq.s32.totalorder %s26, 0
      %p68 = por %p66, %p67
      %p69 = scmp.ne.s32.totalorder %s57, %s58
      %p70 = scmp.eq.s32.totalorder %s27, 1
      %p71 = por %p69, %p70
      %p73 = scmp.ne.s32.totalorder %s58, %s72
      %p74 = scmp.eq.s32.totalorder %s27, 0
      %p75 = por %p73, %p74
      %s77 = sadd.s32 %s76, 1
      %p80 = scmp.eq.s32.totalorder %s21, 1
      %p81 = scmp.ne.s32.totalorder %s76, %s78
      %p82 = scmp.eq.s32.totalorder %s21, 0
      %p83 = por %p81, %p82
      %p84 = scmp.ne.s32.totalorder %s76, %s78
      %p85 = scmp.eq.s32.totalorder %s26, 1
      %p86 = por %p84, %p85
      %p87 = scmp.ne.s32.totalorder %s78, %s79
      %p88 = scmp.eq.s32.totalorder %s26, 0
      %p89 = por %p87, %p88
      %p90 = scmp.ne.s32.totalorder %s78, %s79
      %p91 = scmp.eq.s32.totalorder %s27, 1
      %p92 = por %p90, %p91
      %p94 = scmp.ne.s32.totalorder %s79, %s93
      %p95 = scmp.eq.s32.totalorder %s27, 0
      %p96 = por %p94, %p95
      %s98 = sadd.s32 %s97, 1
      %p101 = scmp.eq.s32.totalorder %s21, 1
      %p102 = scmp.ne.s32.totalorder %s97, %s99
      %p103 = scmp.eq.s32.totalorder %s21, 0
      %p104 = por %p102, %p103
      %p105 = scmp.ne.s32.totalorder %s97, %s99
      %p106 = scmp.eq.s32.totalorder %s26, 1
      %p107 = por %p105, %p106
      %p108 = scmp.ne.s32.totalorder %s99, %s100
      %p109 = scmp.eq.s32.totalorder %s26, 0
      %p110 = por %p108, %p109
      %p111 = scmp.ne.s32.totalorder %s99, %s100
      %p112 = scmp.eq.s32.totalorder %s27, 1
      %p113 = por %p111, %p112
      %p115 = scmp.ne.s32.totalorder %s100, %s114
      %p116 = scmp.eq.s32.totalorder %s27, 0
      %p117 = por %p115, %p116
      %s119 = sadd.s32 %s118, 1
      %p122 = scmp.eq.s32.totalorder %s21, 1
      %p123 = scmp.ne.s32.totalorder %s118, %s120
      %p124 = scmp.eq.s32.totalorder %s21, 0
      %p125 = por %p123, %p124
      %p126 = scmp.ne.s32.totalorder %s118, %s120
      %p127 = scmp.eq.s32.totalorder %s26, 1
      %p128 = por %p126, %p127
      %p129 = scmp.ne.s32.totalorder %s120, %s121
      %p130 = scmp.eq.s32.totalorder %s26, 0
      %p131 = por %p129, %p130
      %p132 = scmp.ne.s32.totalorder %s120, %s121
      %p133 = scmp.eq.s32.totalorder %s27, 1
      %p134 = por %p132, %p133
      %p136 = scmp.ne.s32.totalorder %s121, %s135
      %p137 = scmp.eq.s32.totalorder %s27, 0
      %p138 = por %p136, %p137
      %s140 = sadd.s32 %s139, 1
      %p143 = scmp.eq.s32.totalorder %s21, 1
      %p144 = scmp.ne.s32.totalorder %s139, %s141
      %p145 = scmp.eq.s32.totalorder %s21, 0
      %p146 = por %p144, %p145
      %p147 = scmp.ne.s32.totalorder %s139, %s141
      %p148 = scmp.eq.s32.totalorder %s26, 1
      %p149 = por %p147, %p148
      %p150 = scmp.ne.s32.totalorder %s141, %s142
      %p151 = scmp.eq.s32.totalorder %s26, 0
      %p152 = por %p150, %p151
      %p153 = scmp.ne.s32.totalorder %s141, %s142
      %p154 = scmp.eq.s32.totalorder %s27, 1
      %p155 = por %p153, %p154
      %p157 = scmp.ne.s32.totalorder %s142, %s156
      %p158 = scmp.eq.s32.totalorder %s27, 0
      %p159 = por %p157, %p158
      %s161 = sadd.s32 %s160, 1
      %p164 = scmp.eq.s32.totalorder %s21, 1
      %p165 = scmp.ne.s32.totalorder %s160, %s162
      %p166 = scmp.eq.s32.totalorder %s21, 0
      %p167 = por %p165, %p166
      %p168 = scmp.ne.s32.totalorder %s160, %s162
      %p169 = scmp.eq.s32.totalorder %s26, 1
      %p170 = por %p168, %p169
      %p171 = scmp.ne.s32.totalorder %s162, %s163
      %p172 = scmp.eq.s32.totalorder %s26, 0
      %p173 = por %p171, %p172
      %p174 = scmp.ne.s32.totalorder %s162, %s163
      %p175 = scmp.eq.s32.totalorder %s27, 1
      %p176 = por %p174, %p175
      %p178 = scmp.ne.s32.totalorder %s163, %s177
      %p179 = scmp.eq.s32.totalorder %s27, 0
      %p180 = por %p178, %p179
      %s181 = ssub.s32 %s21, %s28
      %p182 = scmp.eq.s32.totalorder %s181, 0
      %s184 = sadd.s32 %s183, 1
      %s185 = scalar_select %p182, %s183, %s184
      %p188 = pneg %p182
      %p189 = scmp.eq.s32.totalorder %s21, 1
      %p190 = por %p188, %p189
      %p191 = scmp.ne.s32.totalorder %s183, %s186
      %p192 = scmp.eq.s32.totalorder %s21, 0
      %p193 = por %p191, %p192
      %p194 = scmp.ne.s32.totalorder %s183, %s186
      %p195 = scmp.eq.s32.totalorder %s26, 1
      %p196 = por %p194, %p195
      %p197 = scmp.ne.s32.totalorder %s186, %s187
      %p198 = scmp.eq.s32.totalorder %s26, 0
      %p199 = por %p197, %p198
      %p200 = scmp.ne.s32.totalorder %s186, %s187
      %p201 = scmp.eq.s32.totalorder %s27, 1
      %p202 = por %p200, %p201
      %p204 = scmp.ne.s32.totalorder %s187, %s203
      %p205 = scmp.eq.s32.totalorder %s27, 0
      %p206 = por %p204, %p205
      %p207 = scmp.le.s32.totalorder 1, %s21
      %p208 = scmp.lt.s32.totalorder %s21, 3
      %p209 = pnand %p207, %p208
      %p210 = pneg %p209
      // Predicated region
      $region9: #{tpu_custom_call.1} parent=5 // pred_check
        _
      $region10: #{tpu_custom_call.1} parent=5 // pred_check_branch
        %212 = sbr.rel (%p209) target = $region12
      $region11: #{tpu_custom_call.1} parent=5 // pred_region
        %s213 = ssub.s32 %s21, 1
        // Predicated region
        $region13: #{tpu_custom_call.1} parent=11 // pred_check
          %p214 = pneg %p68
        $region14: #{tpu_custom_call.1} parent=11 // pred_check_branch
          %216 = sbr.rel (%p214) target = $region16
        $region15: #{tpu_custom_call.1} parent=11 // pred_region
          %218 = vsyncadd [#allocation6], 0
          %s220 = sshll.u32 %s1, 4
          %s221 = int_to_ptr.hbm [resolvable:$true] %s220
          %s222 = sshll.u32 [#allocation5], 4
          %s223 = int_to_ptr.vmem [resolvable:$true] %s222
          %225 = dma.hbm_to_vmem [thread:$0]  %s221, 16, %s223, [#allocation6]
        $region16: #{tpu_custom_call.1} parent=11 // pred_fallthru
          _
        // Predicated region
        $region17: #{tpu_custom_call.1} parent=11 // pred_check
          %p226 = pneg %p89
        $region18: #{tpu_custom_call.1} parent=11 // pred_check_branch
          %228 = sbr.rel (%p226) target = $region20
        $region19: #{tpu_custom_call.1} parent=11 // pred_region
          _
        $region20: #{tpu_custom_call.1} parent=11 // pred_fallthru
          _
        // Predicated region
        $region21: #{tpu_custom_call.1} parent=11 // pred_check
          %p229 = pneg %p110
        $region22: #{tpu_custom_call.1} parent=11 // pred_check_branch
          %231 = sbr.rel (%p229) target = $region24
        $region23: #{tpu_custom_call.1} parent=11 // pred_region
          %233 = vsyncadd [#allocation6], 0
          %s234 = sshll.u32 %s3, 4
          %s235 = int_to_ptr.hbm [resolvable:$true] %s234
          %s236 = sshll.u32 [#allocation7], 4
          %s237 = int_to_ptr.vmem [resolvable:$true] %s236
          %242 = dma.hbm_to_vmem [thread:$0]  %s235, 1024, %s237, [#allocation6], 64, 64, 4
        $region24: #{tpu_custom_call.1} parent=11 // pred_fallthru
          _
        // Predicated region
        $region25: #{tpu_custom_call.1} parent=11 // pred_check
          %p243 = pneg %p131
        $region26: #{tpu_custom_call.1} parent=11 // pred_check_branch
          %245 = sbr.rel (%p243) target = $region28
        $region27: #{tpu_custom_call.1} parent=11 // pred_region
          _
        $region28: #{tpu_custom_call.1} parent=11 // pred_fallthru
          _
        // Predicated region
        $region29: #{tpu_custom_call.1} parent=11 // pred_check
          %p246 = pneg %p152
        $region30: #{tpu_custom_call.1} parent=11 // pred_check_branch
          %248 = sbr.rel (%p246) target = $region32
        $region31: #{tpu_custom_call.1} parent=11 // pred_region
          %250 = vsyncadd [#allocation9], 0
          %s251 = sshll.u32 %s5, 4
          %s252 = int_to_ptr.hbm [resolvable:$true] %s251
          %s253 = sshll.u32 [#allocation8], 4
          %s254 = int_to_ptr.vmem [resolvable:$true] %s253
          %259 = dma.hbm_to_vmem [thread:$0]  %s252, 1024, %s254, [#allocation9], 64, 64, 4
        $region32: #{tpu_custom_call.1} parent=11 // pred_fallthru
          _
        // Predicated region
        $region33: #{tpu_custom_call.1} parent=11 // pred_check
          %p260 = pneg %p173
        $region34: #{tpu_custom_call.1} parent=11 // pred_check_branch
          %262 = sbr.rel (%p260) target = $region36
        $region35: #{tpu_custom_call.1} parent=11 // pred_region
          _
        $region36: #{tpu_custom_call.1} parent=11 // pred_fallthru
          _
      $region12: #{tpu_custom_call.1} parent=5 // pred_fallthru
        _
      %p263 = scmp.lt.s32.totalorder %s21, 2
      // Predicated region
      $region37: #{tpu_custom_call.1} parent=5 // pred_check
        %p264 = pneg %p263
      $region38: #{tpu_custom_call.1} parent=5 // pred_check_branch
        %266 = sbr.rel (%p264) target = $region40
      $region39: #{tpu_custom_call.1} parent=5 // pred_region
        // Predicated region
        $region41: #{tpu_custom_call.1} parent=39 // pred_check
          %p267 = pneg %p41
        $region42: #{tpu_custom_call.1} parent=39 // pred_check_branch
          %269 = sbr.rel (%p267) target = $region44
        $region43: #{tpu_custom_call.1} parent=39 // pred_region
          %s270 = sand.u32 %s31, 1
          %s271 = scalar_lea.sflag [#allocation3], %s270
          %s272 = sand.u32 %s31, 1
          %s273 = smul.addr %s272, 8
          %s274 = scalar_lea.vmem [#allocation2], %s273
          %276 = vsyncadd %s271, 0
          %s277 = smul.addr %s21, 8
          %s278 = scalar_lea.hbm %s0, %s277
          %s280 = sshll.u32 %s278, 4
          %s281 = int_to_ptr.hbm [resolvable:$true] %s280
          %s282 = sshll.u32 %s274, 4
          %s283 = int_to_ptr.vmem [resolvable:$true] %s282
          %285 = dma.hbm_to_vmem [thread:$0]  %s281, 128, %s283, %s271
        $region44: #{tpu_custom_call.1} parent=39 // pred_fallthru
          _
      $region40: #{tpu_custom_call.1} parent=5 // pred_fallthru
        _
      %p286 = scmp.le.s32.totalorder 1, %s21
      %p287 = scmp.lt.s32.totalorder %s21, 3
      %p288 = pnand %p286, %p287
      %p289 = pneg %p288
      // Predicated region
      $region45: #{tpu_custom_call.1} parent=5 // pred_check
        _
      $region46: #{tpu_custom_call.1} parent=5 // pred_check_branch
        %291 = sbr.rel (%p288) target = $region48
      $region47: #{tpu_custom_call.1} parent=5 // pred_region
        %s292 = ssub.s32 %s21, 1
        %s293 = sand.u32 %s34, 1
        %s294 = scalar_lea.sflag [#allocation3], %s293
        %s295 = sand.u32 %s34, 1
        %s296 = smul.addr %s295, 8
        %s297 = scalar_lea.vmem [#allocation2], %s296
        // Predicated region
        $region49: #{tpu_custom_call.1} parent=47 // pred_check
          %p298 = pneg %p47
        $region50: #{tpu_custom_call.1} parent=47 // pred_check_branch
          %300 = sbr.rel (%p298) target = $region52
        $region51: #{tpu_custom_call.1} parent=47 // pred_region
          %302 = dma.done %s294, 128
        $region52: #{tpu_custom_call.1} parent=47 // pred_fallthru
          _
        // Predicated region
        $region53: #{tpu_custom_call.1} parent=47 // pred_check
          %p303 = pneg %p68
        $region54: #{tpu_custom_call.1} parent=47 // pred_check_branch
          %305 = sbr.rel (%p303) target = $region56
        $region55: #{tpu_custom_call.1} parent=47 // pred_region
          %307 = dma.done [#allocation6], 16
        $region56: #{tpu_custom_call.1} parent=47 // pred_fallthru
          _
        // Predicated region
        $region57: #{tpu_custom_call.1} parent=47 // pred_check
          %p308 = pneg %p110
        $region58: #{tpu_custom_call.1} parent=47 // pred_check_branch
          %310 = sbr.rel (%p308) target = $region60
        $region59: #{tpu_custom_call.1} parent=47 // pred_region
          %312 = dma.done [#allocation6], 1024
        $region60: #{tpu_custom_call.1} parent=47 // pred_fallthru
          _
        // Predicated region
        $region61: #{tpu_custom_call.1} parent=47 // pred_check
          %p313 = pneg %p152
        $region62: #{tpu_custom_call.1} parent=47 // pred_check_branch
          %315 = sbr.rel (%p313) target = $region64
        $region63: #{tpu_custom_call.1} parent=47 // pred_region
          %317 = dma.done [#allocation9], 1024
        $region64: #{tpu_custom_call.1} parent=47 // pred_fallthru
          _
        %s318 = sand.u32 %s34, 1
        %s319 = scalar_lea.sflag [#allocation3], %s318
        %s320 = sand.u32 %s34, 1
        %s321 = smul.addr %s320, 8
        %s322 = scalar_lea.vmem [#allocation2], %s321
        %p323 = pneg %p47
        %p324 = pneg %p44
        %p325 = pneg %p68
        %p326 = pneg %p65
        %p327 = pneg %p89
        %p328 = pneg %p86
        %p329 = pneg %p110
        %p330 = pneg %p107
        %p331 = pneg %p131
        %p332 = pneg %p128
        %p333 = pneg %p152
        %p334 = pneg %p149
        %p335 = pneg %p173
        %p336 = pneg %p170
        %p337 = pneg %p199
        %p338 = pneg %p196
        %s339 = sand.u32 %s186, 1
        %s340 = scalar_lea.sflag [#allocation4], %s339
        %s341 = sand.u32 %s186, 1
        %s342 = smul.addr %s341, 8
        %s343 = scalar_lea.vmem [#allocation10], %s342
        %v344 = vld [vmem:[%s297] sm:$0xff]
        %345 = vadd.xlane.f32.xlu0 %v344
        %v346 = vpop.xlane.xlu0 %345
        %v347 = vmul.f32 %v346, 0.03125
        %v348 = vmul.f32 %v344, %v344
        %349 = vadd.xlane.f32.xlu0 %v348
        %v350 = vpop.xlane.xlu0 %349
        %v351 = vmul.f32 %v350, 0.03125
        %v352 = vmul.f32 %v347, %v347
        %v353 = vsub.f32 %v351, %v352
        %v354 = vsub.f32 %v344, %v347
        %v355 = vadd.f32 %v353, 1e-05
        %v356 = vrsqrt.pop %v355
        %v357 = vmul.f32 %v356, %v355
        %v358 = vmul.f32 %v357, %v356
        %v359 = vmul.f32 0.5, %v358
        %v360 = vsub.f32 1.5, %v359
        %v361 = vmul.f32 %v356, %v360
        %vm362 = vweird.f32 %v355
        %vm363 = vweird.f32 %v356
        %vm364 = vmor %vm362, %vm363
        %v365 = vsel %vm364, %v356, %v361
        %v366 = vmul.f32 %v354, %v365
        %v367 = vld [vmem:[#allocation5] sm:$0x1]
        %v369 = vperm.slane %v367, 0
        %v371 = vmul.f32 %v366, %v369
        %v372 = vld [vmem:[%s2] sm:$0x1]
        %v374 = vperm.slane %v372, 0
        %v376 = vadd.f32 %v371, %v374
        %v377 = vpack.c.bf16 %v376, %v376
        %v378 = vld [vmem:[#allocation7] sm:$0xf]
        %v379 = vld [vmem:[#allocation7 + $0x4] sm:$0xf]
        %v380 = vld [vmem:[#allocation7 + $0x8] sm:$0xf]
        %v381 = vld [vmem:[#allocation7 + $0xc] sm:$0xf]
        %v382 = vld [vmem:[#allocation7 + $0x10] sm:$0xf]
        %v383 = vld [vmem:[#allocation7 + $0x14] sm:$0xf]
        %v384 = vld [vmem:[#allocation7 + $0x18] sm:$0xf]
        %v385 = vld [vmem:[#allocation7 + $0x1c] sm:$0xf]
        %v386 = vld [vmem:[#allocation7 + $0x20] sm:$0xf]
        %v387 = vld [vmem:[#allocation7 + $0x24] sm:$0xf]
        %v388 = vld [vmem:[#allocation7 + $0x28] sm:$0xf]
        %v389 = vld [vmem:[#allocation7 + $0x2c] sm:$0xf]
        %v390 = vld [vmem:[#allocation7 + $0x30] sm:$0xf]
        %v391 = vld [vmem:[#allocation7 + $0x34] sm:$0xf]
        %v392 = vld [vmem:[#allocation7 + $0x38] sm:$0xf]
        %v393 = vld [vmem:[#allocation7 + $0x3c] sm:$0xf]
        %v394 = vld [vmem:[%s4] sm:$0x1]
        %v396 = vperm.slane %v394, 0
        %v414 = vunpack.c.l.b16 %v378
        %v415 = vunpack.c.l.b16 %v379
        %v416 = vunpack.c.l.b16 %v380
        %v417 = vunpack.c.l.b16 %v381
        %v418 = vunpack.c.l.b16 %v382
        %v419 = vunpack.c.l.b16 %v383
        %v420 = vunpack.c.l.b16 %v384
        %v421 = vunpack.c.l.b16 %v385
        %v422 = vunpack.c.l.b16 %v386
        %v423 = vunpack.c.l.b16 %v387
        %v424 = vunpack.c.l.b16 %v388
        %v425 = vunpack.c.l.b16 %v389
        %v426 = vunpack.c.l.b16 %v390
        %v427 = vunpack.c.l.b16 %v391
        %v428 = vunpack.c.l.b16 %v392
        %v429 = vunpack.c.l.b16 %v393
        %v430 = vpack.c.b16 %v415, %v414
        %v431 = vpack.c.b16 %v417, %v416
        %v432 = vpack.c.b16 %v419, %v418
        %v433 = vpack.c.b16 %v421, %v420
        %v434 = vpack.c.b16 %v423, %v422
        %v435 = vpack.c.b16 %v425, %v424
        %v436 = vpack.c.b16 %v427, %v426
        %v437 = vpack.c.b16 %v429, %v428
        %446 = vmatpush.bf16.msra.mxu0 %v437
        %447 = vmatpush.bf16.msra.mxu0 %v436
        %448 = vmatpush.bf16.msra.mxu0 %v435
        %449 = vmatpush.bf16.msra.mxu0 %v434
        %450 = vmatpush.bf16.msra.mxu0 %v433
        %451 = vmatpush.bf16.msra.mxu0 %v432
        %452 = vmatpush.bf16.msra.mxu0 %v431
        %453 = vmatpush.bf16.msra.mxu0 %v430
        %454 = vmatmul.bf16.gmra.mxu0 %v377
        %v455 = vpop.f32.mrf.mxu0
        %v456 = vadd.f32 %v396, %v455
        %v457 = vpop.f32.mrf.mxu0
        %458 = vdwg.mxu0
        %v459 = vpack.c.bf16 %v456, %v456
        %v460 = vunpack.c.l.bf16 %v459
        %v461 = vmul.f32 %v460, %v460
        %v462 = vpack.c.bf16 %v461, %v461
        %v463 = vunpack.c.l.bf16 %v462
        %v464 = vmul.f32 %v460, %v463
        %v465 = vpack.c.bf16 %v464, %v464
        %v466 = vunpack.c.l.bf16 %v465
        %v467 = vmul.f32 %v466, 0.044677734
        %v468 = vpack.c.bf16 %v467, %v467
        %v469 = vunpack.c.l.bf16 %v468
        %v470 = vadd.f32 %v460, %v469
        %v471 = vpack.c.bf16 %v470, %v470
        %v472 = vunpack.c.l.bf16 %v471
        %v473 = vmul.f32 %v472, 0.796875
        %v474 = vpack.c.bf16 %v473, %v473
        %v475 = vunpack.c.l.bf16 %v474
        %v476 = vtanh.pop %v475
        %v477 = vpack.c.bf16 %v476, %v476
        %v478 = vunpack.c.l.bf16 %v477
        %v479 = vadd.f32 %v478, 1.0
        %v480 = vpack.c.bf16 %v479, %v479
        %v481 = vunpack.c.l.bf16 %v480
        %v482 = vmul.f32 %v481, 0.5
        %v483 = vpack.c.bf16 %v482, %v482
        %v484 = vunpack.c.l.bf16 %v483
        %v485 = vmul.f32 %v460, %v484
        %v486 = vpack.c.bf16 %v485, %v485
        %v487 = vld [vmem:[#allocation8] sm:$0xf]
        %v488 = vld [vmem:[#allocation8 + $0x4] sm:$0xf]
        %v489 = vld [vmem:[#allocation8 + $0x8] sm:$0xf]
        %v490 = vld [vmem:[#allocation8 + $0xc] sm:$0xf]
        %v491 = vld [vmem:[#allocation8 + $0x10] sm:$0xf]
        %v492 = vld [vmem:[#allocation8 + $0x14] sm:$0xf]
        %v493 = vld [vmem:[#allocation8 + $0x18] sm:$0xf]
        %v494 = vld [vmem:[#allocation8 + $0x1c] sm:$0xf]
        %v495 = vld [vmem:[#allocation8 + $0x20] sm:$0xf]
        %v496 = vld [vmem:[#allocation8 + $0x24] sm:$0xf]
        %v497 = vld [vmem:[#allocation8 + $0x28] sm:$0xf]
        %v498 = vld [vmem:[#allocation8 + $0x2c] sm:$0xf]
        %v499 = vld [vmem:[#allocation8 + $0x30] sm:$0xf]
        %v500 = vld [vmem:[#allocation8 + $0x34] sm:$0xf]
        %v501 = vld [vmem:[#allocation8 + $0x38] sm:$0xf]
        %v502 = vld [vmem:[#allocation8 + $0x3c] sm:$0xf]
        %v503 = vld [vmem:[%s6] sm:$0x1]
        %v505 = vperm.slane %v503, 0
        %v523 = vunpack.c.l.b16 %v487
        %v524 = vunpack.c.l.b16 %v488
        %v525 = vunpack.c.l.b16 %v489
        %v526 = vunpack.c.l.b16 %v490
        %v527 = vunpack.c.l.b16 %v491
        %v528 = vunpack.c.l.b16 %v492
        %v529 = vunpack.c.l.b16 %v493
        %v530 = vunpack.c.l.b16 %v494
        %v531 = vunpack.c.l.b16 %v495
        %v532 = vunpack.c.l.b16 %v496
        %v533 = vunpack.c.l.b16 %v497
        %v534 = vunpack.c.l.b16 %v498
        %v535 = vunpack.c.l.b16 %v499
        %v536 = vunpack.c.l.b16 %v500
        %v537 = vunpack.c.l.b16 %v501
        %v538 = vunpack.c.l.b16 %v502
        %v539 = vpack.c.b16 %v524, %v523
        %v540 = vpack.c.b16 %v526, %v525
        %v541 = vpack.c.b16 %v528, %v527
        %v542 = vpack.c.b16 %v530, %v529
        %v543 = vpack.c.b16 %v532, %v531
        %v544 = vpack.c.b16 %v534, %v533
        %v545 = vpack.c.b16 %v536, %v535
        %v546 = vpack.c.b16 %v538, %v537
        %555 = vmatpush.bf16.msra.mxu0 %v546
        %556 = vmatpush.bf16.msra.mxu0 %v545
        %557 = vmatpush.bf16.msra.mxu0 %v544
        %558 = vmatpush.bf16.msra.mxu0 %v543
        %559 = vmatpush.bf16.msra.mxu0 %v542
        %560 = vmatpush.bf16.msra.mxu0 %v541
        %561 = vmatpush.bf16.msra.mxu0 %v540
        %562 = vmatpush.bf16.msra.mxu0 %v539
        %563 = vmatmul.bf16.gmra.mxu0 %v486
        %v564 = vpop.f32.mrf.mxu0
        %v565 = vadd.f32 %v505, %v564
        %v566 = vpop.f32.mrf.mxu0
        %567 = vdwg.mxu0
        %v568 = vadd.f32 %v565, %v344
        %569 = vst [vmem:[%s343] sm:$0xff] %v568
        %s570 = sand.u32 %s186, 1
        %s571 = scalar_lea.sflag [#allocation4], %s570
        %s572 = sand.u32 %s186, 1
        %s573 = smul.addr %s572, 8
        %s574 = scalar_lea.vmem [#allocation10], %s573
        // Predicated region
        $region65: #{tpu_custom_call.1} parent=47 // pred_check
          %p575 = pneg %p196
        $region66: #{tpu_custom_call.1} parent=47 // pred_check_branch
          %577 = sbr.rel (%p575) target = $region68
        $region67: #{tpu_custom_call.1} parent=47 // pred_region
          %579 = vsyncadd %s571, 0
          %s580 = smul.addr %s26, 8
          %s581 = scalar_lea.hbm %s7, %s580
          %s583 = sshll.u32 %s574, 4
          %s584 = int_to_ptr.vmem [resolvable:$true] %s583
          %s585 = sshll.u32 %s581, 4
          %s586 = int_to_ptr.hbm [resolvable:$true] %s585
          %588 = dma.vmem_to_hbm [thread:$0]  %s584, 128, %s586, %s571
        $region68: #{tpu_custom_call.1} parent=47 // pred_fallthru
          _
      $region48: #{tpu_custom_call.1} parent=5 // pred_fallthru
        _
      %p589 = scmp.le.s32.totalorder 2, %s21
      // Predicated region
      $region69: #{tpu_custom_call.1} parent=5 // pred_check
        %p590 = pneg %p589
      $region70: #{tpu_custom_call.1} parent=5 // pred_check_branch
        %592 = sbr.rel (%p590) target = $region72
      $region71: #{tpu_custom_call.1} parent=5 // pred_region
        %s593 = ssub.s32 %s21, 2
        // Predicated region
        $region73: #{tpu_custom_call.1} parent=71 // pred_check
          %p594 = pneg %p202
        $region74: #{tpu_custom_call.1} parent=71 // pred_check_branch
          %596 = sbr.rel (%p594) target = $region76
        $region75: #{tpu_custom_call.1} parent=71 // pred_region
          %s597 = sand.u32 %s187, 1
          %s598 = scalar_lea.sflag [#allocation4], %s597
          %s599 = sand.u32 %s187, 1
          %s600 = smul.addr %s599, 8
          %s601 = scalar_lea.vmem [#allocation10], %s600
          %603 = dma.done %s598, 128
        $region76: #{tpu_custom_call.1} parent=71 // pred_fallthru
          _
      $region72: #{tpu_custom_call.1} parent=5 // pred_fallthru
        _
    $region6: #{tpu_custom_call.1} parent=1 // loop_footer
      %s25 = sadd.s32 1, %s21
    $region7: #{tpu_custom_call.1} parent=1 // loop_footer_branch
      %20 = sbr.rel target = $region3
    $region8: #{tpu_custom_call.1} parent=1 // loop_exit
      _
    %604 = vsyncpa [#allocation3], 1
    %s605 = scalar_lea.sflag [#allocation3], 1
    %606 = vsyncpa %s605, 1
    %607 = vsyncpa [#allocation6], 1
    %608 = vsyncpa [#allocation9], 1
    %609 = vsyncpa [#allocation4], 1
    %s610 = scalar_lea.sflag [#allocation4], 1
    %611 = vsyncpa %s610, 1

// kernel: tpu_custom_call.1
$region0: #{tpu_custom_call.1}
  #allocation0 [shape = 'u32[]', space=smem, size = 0x4, offset = 0x4, fixed_abs, tag = 'smem constant byte address 0x4 - core index']
  #allocation1 [shape = 'u32[72,128]{1,0:T(1,128)}', space=vmem, size = 0x9000, scoped, tag = 'internal scratch']
  %s0 = inlined_call_operand.hbm [shape: f32[16,128], index: 0, kind: input, shape index: {}]
  %s1 = inlined_call_operand.hbm [shape: f32[1,128], index: 1, kind: input, shape index: {}]
  %s2 = inlined_call_operand.vmem [shape: f32[1,128], index: 2, kind: input, shape index: {}]
  %s3 = inlined_call_operand.hbm [shape: bf16[128,128], index: 3, kind: input, shape index: {}]
  %s4 = inlined_call_operand.vmem [shape: f32[1,128], index: 4, kind: input, shape index: {}]
  %s5 = inlined_call_operand.hbm [shape: bf16[128,128], index: 5, kind: input, shape index: {}]
  %s6 = inlined_call_operand.vmem [shape: f32[1,128], index: 6, kind: input, shape index: {}]
  %s7 = inlined_call_operand.hbm [shape: f32[16,128], index: 7, kind: output, shape index: {}]
  %s8 = sld [smem:[#allocation0]]
  $region77: #{tpu_custom_call.1} parent=0
    _
  %s10 = ssub.s32 1, %s8
  %s11 = scalar_select 0, %s10, %s8
  $region1: #{tpu_custom_call.1} parent=0
    #allocation2 [shape = 'u8[8192]{0}', space=vmem, size = 0x2000, scoped, tag = 'input window, operand 0']
    #allocation3 [shape = 's32[2]{0}', space=sflag, size = 0x8, scoped, tag = 'scoped memory for tpu_custom_call.1']
    #allocation4 [shape = 's32[2]{0}', space=sflag, size = 0x8, scoped, tag = 'scoped memory for tpu_custom_call.1']
    #allocation5 [shape = 'u8[512]{0}', space=vmem, size = 0x400, scoped, tag = 'input window, operand 1, single buffered']
    #allocation6 [shape = 's32[1]{0}', space=sflag, size = 0x4, scoped, tag = 'scoped memory for tpu_custom_call.1']
    #allocation7 [shape = 'u8[32768]{0}', space=vmem, size = 0x8000, scoped, tag = 'input window, operand 3, single buffered']
    #allocation8 [shape = 'u8[32768]{0}', space=vmem, size = 0x8000, scoped, tag = 'input window, operand 5, single buffered']
    #allocation9 [shape = 's32[1]{0}', space=sflag, size = 0x4, scoped, tag = 'scoped memory for tpu_custom_call.1']
    #allocation10 [shape = 'u8[8192]{0}', space=vmem, size = 0x2000, scoped, tag = 'output window, operand 0']
    %12 = vsyncpa [#allocation3], 0
    %s13 = scalar_lea.sflag [#allocation3], 1
    %14 = vsyncpa %s13, 0
    %15 = vsyncpa [#allocation6], 0
    %16 = vsyncpa [#allocation9], 0
    %17 = vsyncpa [#allocation4], 0
    %s18 = scalar_lea.sflag [#allocation4], 1
    %19 = vsyncpa %s18, 0
    loop: start=0, step=1, limit=4
    $region2: #{tpu_custom_call.1} parent=1 // loop_pre_header
      _
    $region3: #{tpu_custom_call.1} parent=1 // loop_header
      %s21 = sphi 0, %s25
      %p22 = scmp.ge.s32.totalorder %s21, 4
      %s31 = sphi 0, %s33
      %s34 = sphi 0, %s31
      %s35 = sphi 0, %s34
      %s51 = sphi 0, %s35
      %s55 = sphi 0, %s55
      %s57 = sphi 0, %s55
      %s58 = sphi 0, %s57
      %s72 = sphi 0, %s58
      %s76 = sphi 0, %s76
      %s78 = sphi 0, %s76
      %s79 = sphi 0, %s78
      %s93 = sphi 0, %s79
      %s97 = sphi 0, %s97
      %s99 = sphi 0, %s97
      %s100 = sphi 0, %s99
      %s114 = sphi 0, %s100
      %s118 = sphi 0, %s118
      %s120 = sphi 0, %s118
      %s121 = sphi 0, %s120
      %s135 = sphi 0, %s121
      %s139 = sphi 0, %s139
      %s141 = sphi 0, %s139
      %s142 = sphi 0, %s141
      %s156 = sphi 0, %s142
      %s160 = sphi 0, %s160
      %s162 = sphi 0, %s160
      %s163 = sphi 0, %s162
      %s177 = sphi 0, %s163
      %s183 = sphi 0, %s185
      %s186 = sphi 0, %s183
      %s187 = sphi 0, %s186
      %s203 = sphi 0, %s187
    $region4: #{tpu_custom_call.1} parent=1 // loop_header_branch
      %24 = sbr.rel (%p22) target = $region8
    $region5: #{tpu_custom_call.1} parent=1 // loop_body
      %s26 = ssub.s32 %s21, 1
      %s27 = ssub.s32 %s21, 2
      %s28 = sadd.s32 %s21, 1
      %s29 = ssub.s32 %s21, %s28
      %p30 = scmp.eq.s32.totalorder %s29, 0
      %s32 = sadd.s32 %s31, 1
      %s33 = scalar_select %p30, %s31, %s32
      %p36 = pneg %p30
      %p37 = scmp.eq.s32.totalorder %s21, 1
      %p38 = por %p36, %p37
      %p39 = scmp.ne.s32.totalorder %s31, %s34
      %p40 = scmp.eq.s32.totalorder %s21, 0
      %p41 = por %p39, %p40
      %p42 = scmp.ne.s32.totalorder %s31, %s34
      %p43 = scmp.eq.s32.totalorder %s26, 1
      %p44 = por %p42, %p43
      %p45 = scmp.ne.s32.totalorder %s34, %s35
      %p46 = scmp.eq.s32.totalorder %s26, 0
      %p47 = por %p45, %p46
      %p48 = scmp.ne.s32.totalorder %s34, %s35
      %p49 = scmp.eq.s32.totalorder %s27, 1
      %p50 = por %p48, %p49
      %p52 = scmp.ne.s32.totalorder %s35, %s51
      %p53 = scmp.eq.s32.totalorder %s27, 0
      %p54 = por %p52, %p53
      %s56 = sadd.s32 %s55, 1
      %p59 = scmp.eq.s32.totalorder %s21, 1
      %p60 = scmp.ne.s32.totalorder %s55, %s57
      %p61 = scmp.eq.s32.totalorder %s21, 0
      %p62 = por %p60, %p61
      %p63 = scmp.ne.s32.totalorder %s55, %s57
      %p64 = scmp.eq.s32.totalorder %s26, 1
      %p65 = por %p63, %p64
      %p66 = scmp.ne.s32.totalorder %s57, %s58
      %p67 = scmp.eq.s32.totalorder %s26, 0
      %p68 = por %p66, %p67
      %p69 = scmp.ne.s32.totalorder %s57, %s58
      %p70 = scmp.eq.s32.totalorder %s27, 1
      %p71 = por %p69, %p70
      %p73 = scmp.ne.s32.totalorder %s58, %s72
      %p74 = scmp.eq.s32.totalorder %s27, 0
      %p75 = por %p73, %p74
      %s77 = sadd.s32 %s76, 1
      %p80 = scmp.eq.s32.totalorder %s21, 1
      %p81 = scmp.ne.s32.totalorder %s76, %s78
      %p82 = scmp.eq.s32.totalorder %s21, 0
      %p83 = por %p81, %p82
      %p84 = scmp.ne.s32.totalorder %s76, %s78
      %p85 = scmp.eq.s32.totalorder %s26, 1
      %p86 = por %p84, %p85
      %p87 = scmp.ne.s32.totalorder %s78, %s79
      %p88 = scmp.eq.s32.totalorder %s26, 0
      %p89 = por %p87, %p88
      %p90 = scmp.ne.s32.totalorder %s78, %s79
      %p91 = scmp.eq.s32.totalorder %s27, 1
      %p92 = por %p90, %p91
      %p94 = scmp.ne.s32.totalorder %s79, %s93
      %p95 = scmp.eq.s32.totalorder %s27, 0
      %p96 = por %p94, %p95
      %s98 = sadd.s32 %s97, 1
      %p101 = scmp.eq.s32.totalorder %s21, 1
      %p102 = scmp.ne.s32.totalorder %s97, %s99
      %p103 = scmp.eq.s32.totalorder %s21, 0
      %p104 = por %p102, %p103
      %p105 = scmp.ne.s32.totalorder %s97, %s99
      %p106 = scmp.eq.s32.totalorder %s26, 1
      %p107 = por %p105, %p106
      %p108 = scmp.ne.s32.totalorder %s99, %s100
      %p109 = scmp.eq.s32.totalorder %s26, 0
      %p110 = por %p108, %p109
      %p111 = scmp.ne.s32.totalorder %s99, %s100
      %p112 = scmp.eq.s32.totalorder %s27, 1
      %p113 = por %p111, %p112
      %p115 = scmp.ne.s32.totalorder %s100, %s114
      %p116 = scmp.eq.s32.totalorder %s27, 0
      %p117 = por %p115, %p116
      %s119 = sadd.s32 %s118, 1
      %p122 = scmp.eq.s32.totalorder %s21, 1
      %p123 = scmp.ne.s32.totalorder %s118, %s120
      %p124 = scmp.eq.s32.totalorder %s21, 0
      %p125 = por %p123, %p124
      %p126 = scmp.ne.s32.totalorder %s118, %s120
      %p127 = scmp.eq.s32.totalorder %s26, 1
      %p128 = por %p126, %p127
      %p129 = scmp.ne.s32.totalorder %s120, %s121
      %p130 = scmp.eq.s32.totalorder %s26, 0
      %p131 = por %p129, %p130
      %p132 = scmp.ne.s32.totalorder %s120, %s121
      %p133 = scmp.eq.s32.totalorder %s27, 1
      %p134 = por %p132, %p133
      %p136 = scmp.ne.s32.totalorder %s121, %s135
      %p137 = scmp.eq.s32.totalorder %s27, 0
      %p138 = por %p136, %p137
      %s140 = sadd.s32 %s139, 1
      %p143 = scmp.eq.s32.totalorder %s21, 1
      %p144 = scmp.ne.s32.totalorder %s139, %s141
      %p145 = scmp.eq.s32.totalorder %s21, 0
      %p146 = por %p144, %p145
      %p147 = scmp.ne.s32.totalorder %s139, %s141
      %p148 = scmp.eq.s32.totalorder %s26, 1
      %p149 = por %p147, %p148
      %p150 = scmp.ne.s32.totalorder %s141, %s142
      %p151 = scmp.eq.s32.totalorder %s26, 0
      %p152 = por %p150, %p151
      %p153 = scmp.ne.s32.totalorder %s141, %s142
      %p154 = scmp.eq.s32.totalorder %s27, 1
      %p155 = por %p153, %p154
      %p157 = scmp.ne.s32.totalorder %s142, %s156
      %p158 = scmp.eq.s32.totalorder %s27, 0
      %p159 = por %p157, %p158
      %s161 = sadd.s32 %s160, 1
      %p164 = scmp.eq.s32.totalorder %s21, 1
      %p165 = scmp.ne.s32.totalorder %s160, %s162
      %p166 = scmp.eq.s32.totalorder %s21, 0
      %p167 = por %p165, %p166
      %p168 = scmp.ne.s32.totalorder %s160, %s162
      %p169 = scmp.eq.s32.totalorder %s26, 1
      %p170 = por %p168, %p169
      %p171 = scmp.ne.s32.totalorder %s162, %s163
      %p172 = scmp.eq.s32.totalorder %s26, 0
      %p173 = por %p171, %p172
      %p174 = scmp.ne.s32.totalorder %s162, %s163
      %p175 = scmp.eq.s32.totalorder %s27, 1
      %p176 = por %p174, %p175
      %p178 = scmp.ne.s32.totalorder %s163, %s177
      %p179 = scmp.eq.s32.totalorder %s27, 0
      %p180 = por %p178, %p179
      %s181 = ssub.s32 %s21, %s28
      %p182 = scmp.eq.s32.totalorder %s181, 0
      %s184 = sadd.s32 %s183, 1
      %s185 = scalar_select %p182, %s183, %s184
      %p188 = pneg %p182
      %p189 = scmp.eq.s32.totalorder %s21, 1
      %p190 = por %p188, %p189
      %p191 = scmp.ne.s32.totalorder %s183, %s186
      %p192 = scmp.eq.s32.totalorder %s21, 0
      %p193 = por %p191, %p192
      %p194 = scmp.ne.s32.totalorder %s183, %s186
      %p195 = scmp.eq.s32.totalorder %s26, 1
      %p196 = por %p194, %p195
      %p197 = scmp.ne.s32.totalorder %s186, %s187
      %p198 = scmp.eq.s32.totalorder %s26, 0
      %p199 = por %p197, %p198
      %p200 = scmp.ne.s32.totalorder %s186, %s187
      %p201 = scmp.eq.s32.totalorder %s27, 1
      %p202 = por %p200, %p201
      %p204 = scmp.ne.s32.totalorder %s187, %s203
      %p205 = scmp.eq.s32.totalorder %s27, 0
      %p206 = por %p204, %p205
      %p207 = scmp.le.s32.totalorder 1, %s21
      %p208 = scmp.lt.s32.totalorder %s21, 3
      %p209 = pnand %p207, %p208
      %p210 = pneg %p209
      // Predicated region
      $region9: #{tpu_custom_call.1} parent=5 // pred_check
        _
      $region10: #{tpu_custom_call.1} parent=5 // pred_check_branch
        %212 = sbr.rel (%p209) target = $region12
      $region11: #{tpu_custom_call.1} parent=5 // pred_region
        %s213 = ssub.s32 %s21, 1
        // Predicated region
        $region13: #{tpu_custom_call.1} parent=11 // pred_check
          %p214 = pneg %p68
        $region14: #{tpu_custom_call.1} parent=11 // pred_check_branch
          %216 = sbr.rel (%p214) target = $region16
        $region15: #{tpu_custom_call.1} parent=11 // pred_region
          %218 = vsyncadd [#allocation6], 0
          %s220 = sshll.u32 %s1, 4
          %s221 = int_to_ptr.hbm [resolvable:$true] %s220
          %s222 = sshll.u32 [#allocation5], 4
          %s223 = int_to_ptr.vmem [resolvable:$true] %s222
          %225 = dma.hbm_to_vmem [thread:$0]  %s221, 16, %s223, [#allocation6]
        $region16: #{tpu_custom_call.1} parent=11 // pred_fallthru
          _
        // Predicated region
        $region17: #{tpu_custom_call.1} parent=11 // pred_check
          %p226 = pneg %p89
        $region18: #{tpu_custom_call.1} parent=11 // pred_check_branch
          %228 = sbr.rel (%p226) target = $region20
        $region19: #{tpu_custom_call.1} parent=11 // pred_region
          _
        $region20: #{tpu_custom_call.1} parent=11 // pred_fallthru
          _
        // Predicated region
        $region21: #{tpu_custom_call.1} parent=11 // pred_check
          %p229 = pneg %p110
        $region22: #{tpu_custom_call.1} parent=11 // pred_check_branch
          %231 = sbr.rel (%p229) target = $region24
        $region23: #{tpu_custom_call.1} parent=11 // pred_region
          %233 = vsyncadd [#allocation6], 0
          %s234 = sshll.u32 %s3, 4
          %s235 = int_to_ptr.hbm [resolvable:$true] %s234
          %s236 = sshll.u32 [#allocation7], 4
          %s237 = int_to_ptr.vmem [resolvable:$true] %s236
          %242 = dma.hbm_to_vmem [thread:$0]  %s235, 1024, %s237, [#allocation6], 64, 64, 4
        $region24: #{tpu_custom_call.1} parent=11 // pred_fallthru
          _
        // Predicated region
        $region25: #{tpu_custom_call.1} parent=11 // pred_check
          %p243 = pneg %p131
        $region26: #{tpu_custom_call.1} parent=11 // pred_check_branch
          %245 = sbr.rel (%p243) target = $region28
        $region27: #{tpu_custom_call.1} parent=11 // pred_region
          _
        $region28: #{tpu_custom_call.1} parent=11 // pred_fallthru
          _
        // Predicated region
        $region29: #{tpu_custom_call.1} parent=11 // pred_check
          %p246 = pneg %p152
        $region30: #{tpu_custom_call.1} parent=11 // pred_check_branch
          %248 = sbr.rel (%p246) target = $region32
        $region31: #{tpu_custom_call.1} parent=11 // pred_region
          %250 = vsyncadd [#allocation9], 0
          %s251 = sshll.u32 %s5, 4
          %s252 = int_to_ptr.hbm [resolvable:$true] %s251
          %s253 = sshll.u32 [#allocation8], 4
          %s254 = int_to_ptr.vmem [resolvable:$true] %s253
          %259 = dma.hbm_to_vmem [thread:$0]  %s252, 1024, %s254, [#allocation9], 64, 64, 4
        $region32: #{tpu_custom_call.1} parent=11 // pred_fallthru
          _
        // Predicated region
        $region33: #{tpu_custom_call.1} parent=11 // pred_check
          %p260 = pneg %p173
        $region34: #{tpu_custom_call.1} parent=11 // pred_check_branch
          %262 = sbr.rel (%p260) target = $region36
        $region35: #{tpu_custom_call.1} parent=11 // pred_region
          _
        $region36: #{tpu_custom_call.1} parent=11 // pred_fallthru
          _
      $region12: #{tpu_custom_call.1} parent=5 // pred_fallthru
        _
      %p263 = scmp.lt.s32.totalorder %s21, 2
      // Predicated region
      $region37: #{tpu_custom_call.1} parent=5 // pred_check
        %p264 = pneg %p263
      $region38: #{tpu_custom_call.1} parent=5 // pred_check_branch
        %266 = sbr.rel (%p264) target = $region40
      $region39: #{tpu_custom_call.1} parent=5 // pred_region
        // Predicated region
        $region41: #{tpu_custom_call.1} parent=39 // pred_check
          %p267 = pneg %p41
        $region42: #{tpu_custom_call.1} parent=39 // pred_check_branch
          %269 = sbr.rel (%p267) target = $region44
        $region43: #{tpu_custom_call.1} parent=39 // pred_region
          %s270 = sand.u32 %s31, 1
          %s271 = scalar_lea.sflag [#allocation3], %s270
          %s272 = sand.u32 %s31, 1
          %s273 = smul.addr %s272, 8
          %s274 = scalar_lea.vmem [#allocation2], %s273
          %276 = vsyncadd %s271, 0
          %s277 = smul.addr %s21, 8
          %s278 = scalar_lea.hbm %s0, %s277
          %s280 = sshll.u32 %s278, 4
          %s281 = int_to_ptr.hbm [resolvable:$true] %s280
          %s282 = sshll.u32 %s274, 4
          %s283 = int_to_ptr.vmem [resolvable:$true] %s282
          %285 = dma.hbm_to_vmem [thread:$0]  %s281, 128, %s283, %s271
        $region44: #{tpu_custom_call.1} parent=39 // pred_fallthru
          _
      $region40: #{tpu_custom_call.1} parent=5 // pred_fallthru
        _
      %p286 = scmp.le.s32.totalorder 1, %s21
      %p287 = scmp.lt.s32.totalorder %s21, 3
      %p288 = pnand %p286, %p287
      %p289 = pneg %p288
      // Predicated region
      $region45: #{tpu_custom_call.1} parent=5 // pred_check
        _
      $region46: #{tpu_custom_call.1} parent=5 // pred_check_branch
        %291 = sbr.rel (%p288) target = $region48
      $region47: #{tpu_custom_call.1} parent=5 // pred_region
        %s292 = ssub.s32 %s21, 1
        %s293 = sand.u32 %s34, 1
        %s294 = scalar_lea.sflag [#allocation3], %s293
        %s295 = sand.u32 %s34, 1
        %s296 = smul.addr %s295, 8
        %s297 = scalar_lea.vmem [#allocation2], %s296
        // Predicated region
        $region49: #{tpu_custom_call.1} parent=47 // pred_check
          %p298 = pneg %p47
        $region50: #{tpu_custom_call.1} parent=47 // pred_check_branch
          %300 = sbr.rel (%p298) target = $region52
        $region51: #{tpu_custom_call.1} parent=47 // pred_region
          %302 = dma.done %s294, 128
        $region52: #{tpu_custom_call.1} parent=47 // pred_fallthru
          _
        // Predicated region
        $region53: #{tpu_custom_call.1} parent=47 // pred_check
          %p303 = pneg %p68
        $region54: #{tpu_custom_call.1} parent=47 // pred_check_branch
          %305 = sbr.rel (%p303) target = $region56
        $region55: #{tpu_custom_call.1} parent=47 // pred_region
          %307 = dma.done [#allocation6], 16
        $region56: #{tpu_custom_call.1} parent=47 // pred_fallthru
          _
        // Predicated region
        $region57: #{tpu_custom_call.1} parent=47 // pred_check
          %p308 = pneg %p110
        $region58: #{tpu_custom_call.1} parent=47 // pred_check_branch
          %310 = sbr.rel (%p308) target = $region60
        $region59: #{tpu_custom_call.1} parent=47 // pred_region
          %312 = dma.done [#allocation6], 1024
        $region60: #{tpu_custom_call.1} parent=47 // pred_fallthru
          _
        // Predicated region
        $region61: #{tpu_custom_call.1} parent=47 // pred_check
          %p313 = pneg %p152
        $region62: #{tpu_custom_call.1} parent=47 // pred_check_branch
          %315 = sbr.rel (%p313) target = $region64
        $region63: #{tpu_custom_call.1} parent=47 // pred_region
          %317 = dma.done [#allocation9], 1024
        $region64: #{tpu_custom_call.1} parent=47 // pred_fallthru
          _
        %s318 = sand.u32 %s34, 1
        %s319 = scalar_lea.sflag [#allocation3], %s318
        %s320 = sand.u32 %s34, 1
        %s321 = smul.addr %s320, 8
        %s322 = scalar_lea.vmem [#allocation2], %s321
        %p323 = pneg %p47
        %p324 = pneg %p44
        %p325 = pneg %p68
        %p326 = pneg %p65
        %p327 = pneg %p89
        %p328 = pneg %p86
        %p329 = pneg %p110
        %p330 = pneg %p107
        %p331 = pneg %p131
        %p332 = pneg %p128
        %p333 = pneg %p152
        %p334 = pneg %p149
        %p335 = pneg %p173
        %p336 = pneg %p170
        %p337 = pneg %p199
        %p338 = pneg %p196
        %s339 = sand.u32 %s186, 1
        %s340 = scalar_lea.sflag [#allocation4], %s339
        %s341 = sand.u32 %s186, 1
        %s342 = smul.addr %s341, 8
        %s343 = scalar_lea.vmem [#allocation10], %s342
        %v344 = vld [vmem:[%s297] sm:$0xff]
        %345 = vadd.xlane.f32.xlu0 %v344
        %v346 = vpop.xlane.xlu0 %345
        %v347 = vmul.f32 %v346, 0.03125
        %v348 = vmul.f32 %v344, %v344
        %349 = vadd.xlane.f32.xlu0 %v348
        %v350 = vpop.xlane.xlu0 %349
        %v351 = vmul.f32 %v350, 0.03125
        %v352 = vmul.f32 %v347, %v347
        %v353 = vsub.f32 %v351, %v352
        %v354 = vsub.f32 %v344, %v347
        %v355 = vadd.f32 %v353, 1e-05
        %v356 = vrsqrt.pop %v355
        %v357 = vmul.f32 %v356, %v355
        %v358 = vmul.f32 %v357, %v356
        %v359 = vmul.f32 0.5, %v358
        %v360 = vsub.f32 1.5, %v359
        %v361 = vmul.f32 %v356, %v360
        %vm362 = vweird.f32 %v355
        %vm363 = vweird.f32 %v356
        %vm364 = vmor %vm362, %vm363
        %v365 = vsel %vm364, %v356, %v361
        %v366 = vmul.f32 %v354, %v365
        %v367 = vld [vmem:[#allocation5] sm:$0x1]
        %v369 = vperm.slane %v367, 0
        %v371 = vmul.f32 %v366, %v369
        %v372 = vld [vmem:[%s2] sm:$0x1]
        %v374 = vperm.slane %v372, 0
        %v376 = vadd.f32 %v371, %v374
        %v377 = vpack.c.bf16 %v376, %v376
        %v378 = vld [vmem:[#allocation7] sm:$0xf]
        %v379 = vld [vmem:[#allocation7 + $0x4] sm:$0xf]
        %v380 = vld [vmem:[#allocation7 + $0x8] sm:$0xf]
        %v381 = vld [vmem:[#allocation7 + $0xc] sm:$0xf]
        %v382 = vld [vmem:[#allocation7 + $0x10] sm:$0xf]
        %v383 = vld [vmem:[#allocation7 + $0x14] sm:$0xf]
        %v384 = vld [vmem:[#allocation7 + $0x18] sm:$0xf]
        %v385 = vld [vmem:[#allocation7 + $0x1c] sm:$0xf]
        %v386 = vld [vmem:[#allocation7 + $0x20] sm:$0xf]
        %v387 = vld [vmem:[#allocation7 + $0x24] sm:$0xf]
        %v388 = vld [vmem:[#allocation7 + $0x28] sm:$0xf]
        %v389 = vld [vmem:[#allocation7 + $0x2c] sm:$0xf]
        %v390 = vld [vmem:[#allocation7 + $0x30] sm:$0xf]
        %v391 = vld [vmem:[#allocation7 + $0x34] sm:$0xf]
        %v392 = vld [vmem:[#allocation7 + $0x38] sm:$0xf]
        %v393 = vld [vmem:[#allocation7 + $0x3c] sm:$0xf]
        %v394 = vld [vmem:[%s4] sm:$0x1]
        %v396 = vperm.slane %v394, 0
        %v414 = vunpack.c.l.b16 %v378
        %v415 = vunpack.c.l.b16 %v379
        %v416 = vunpack.c.l.b16 %v380
        %v417 = vunpack.c.l.b16 %v381
        %v418 = vunpack.c.l.b16 %v382
        %v419 = vunpack.c.l.b16 %v383
        %v420 = vunpack.c.l.b16 %v384
        %v421 = vunpack.c.l.b16 %v385
        %v422 = vunpack.c.l.b16 %v386
        %v423 = vunpack.c.l.b16 %v387
        %v424 = vunpack.c.l.b16 %v388
        %v425 = vunpack.c.l.b16 %v389
        %v426 = vunpack.c.l.b16 %v390
        %v427 = vunpack.c.l.b16 %v391
        %v428 = vunpack.c.l.b16 %v392
        %v429 = vunpack.c.l.b16 %v393
        %v430 = vpack.c.b16 %v415, %v414
        %v431 = vpack.c.b16 %v417, %v416
        %v432 = vpack.c.b16 %v419, %v418
        %v433 = vpack.c.b16 %v421, %v420
        %v434 = vpack.c.b16 %v423, %v422
        %v435 = vpack.c.b16 %v425, %v424
        %v436 = vpack.c.b16 %v427, %v426
        %v437 = vpack.c.b16 %v429, %v428
        %446 = vmatpush.bf16.msra.mxu0 %v437
        %447 = vmatpush.bf16.msra.mxu0 %v436
        %448 = vmatpush.bf16.msra.mxu0 %v435
        %449 = vmatpush.bf16.msra.mxu0 %v434
        %450 = vmatpush.bf16.msra.mxu0 %v433
        %451 = vmatpush.bf16.msra.mxu0 %v432
        %452 = vmatpush.bf16.msra.mxu0 %v431
        %453 = vmatpush.bf16.msra.mxu0 %v430
        %454 = vmatmul.bf16.gmra.mxu0 %v377
        %v455 = vpop.f32.mrf.mxu0
        %v456 = vadd.f32 %v396, %v455
        %v457 = vpop.f32.mrf.mxu0
        %458 = vdwg.mxu0
        %v459 = vpack.c.bf16 %v456, %v456
        %v460 = vunpack.c.l.bf16 %v459
        %v461 = vmul.f32 %v460, %v460
        %v462 = vpack.c.bf16 %v461, %v461
        %v463 = vunpack.c.l.bf16 %v462
        %v464 = vmul.f32 %v460, %v463
        %v465 = vpack.c.bf16 %v464, %v464
        %v466 = vunpack.c.l.bf16 %v465
        %v467 = vmul.f32 %v466, 0.044677734
        %v468 = vpack.c.bf16 %v467, %v467
        %v469 = vunpack.c.l.bf16 %v468
        %v470 = vadd.f32 %v460, %v469
        %v471 = vpack.c.bf16 %v470, %v470
        %v472 = vunpack.c.l.bf16 %v471
        %v473 = vmul.f32 %v472, 0.796875
        %v474 = vpack.c.bf16 %v473, %v473
        %v475 = vunpack.c.l.bf16 %v474
        %v476 = vtanh.pop %v475
        %v477 = vpack.c.bf16 %v476, %v476
        %v478 = vunpack.c.l.bf16 %v477
        %v479 = vadd.f32 %v478, 1.0
        %v480 = vpack.c.bf16 %v479, %v479
        %v481 = vunpack.c.l.bf16 %v480
        %v482 = vmul.f32 %v481, 0.5
        %v483 = vpack.c.bf16 %v482, %v482
        %v484 = vunpack.c.l.bf16 %v483
        %v485 = vmul.f32 %v460, %v484
        %v486 = vpack.c.bf16 %v485, %v485
        %v487 = vld [vmem:[#allocation8] sm:$0xf]
        %v488 = vld [vmem:[#allocation8 + $0x4] sm:$0xf]
        %v489 = vld [vmem:[#allocation8 + $0x8] sm:$0xf]
        %v490 = vld [vmem:[#allocation8 + $0xc] sm:$0xf]
        %v491 = vld [vmem:[#allocation8 + $0x10] sm:$0xf]
        %v492 = vld [vmem:[#allocation8 + $0x14] sm:$0xf]
        %v493 = vld [vmem:[#allocation8 + $0x18] sm:$0xf]
        %v494 = vld [vmem:[#allocation8 + $0x1c] sm:$0xf]
        %v495 = vld [vmem:[#allocation8 + $0x20] sm:$0xf]
        %v496 = vld [vmem:[#allocation8 + $0x24] sm:$0xf]
        %v497 = vld [vmem:[#allocation8 + $0x28] sm:$0xf]
        %v498 = vld [vmem:[#allocation8 + $0x2c] sm:$0xf]
        %v499 = vld [vmem:[#allocation8 + $0x30] sm:$0xf]
        %v500 = vld [vmem:[#allocation8 + $0x34] sm:$0xf]
        %v501 = vld [vmem:[#allocation8 + $0x38] sm:$0xf]
        %v502 = vld [vmem:[#allocation8 + $0x3c] sm:$0xf]
        %v503 = vld [vmem:[%s6] sm:$0x1]
        %v505 = vperm.slane %v503, 0
        %v523 = vunpack.c.l.b16 %v487
        %v524 = vunpack.c.l.b16 %v488
        %v525 = vunpack.c.l.b16 %v489
        %v526 = vunpack.c.l.b16 %v490
        %v527 = vunpack.c.l.b16 %v491
        %v528 = vunpack.c.l.b16 %v492
        %v529 = vunpack.c.l.b16 %v493
        %v530 = vunpack.c.l.b16 %v494
        %v531 = vunpack.c.l.b16 %v495
        %v532 = vunpack.c.l.b16 %v496
        %v533 = vunpack.c.l.b16 %v497
        %v534 = vunpack.c.l.b16 %v498
        %v535 = vunpack.c.l.b16 %v499
        %v536 = vunpack.c.l.b16 %v500
        %v537 = vunpack.c.l.b16 %v501
        %v538 = vunpack.c.l.b16 %v502
        %v539 = vpack.c.b16 %v524, %v523
        %v540 = vpack.c.b16 %v526, %v525
        %v541 = vpack.c.b16 %v528, %v527
        %v542 = vpack.c.b16 %v530, %v529
        %v543 = vpack.c.b16 %v532, %v531
        %v544 = vpack.c.b16 %v534, %v533
        %v545 = vpack.c.b16 %v536, %v535
        %v546 = vpack.c.b16 %v538, %v537
        %555 = vmatpush.bf16.msra.mxu0 %v546
        %556 = vmatpush.bf16.msra.mxu0 %v545
        %557 = vmatpush.bf16.msra.mxu0 %v544
        %558 = vmatpush.bf16.msra.mxu0 %v543
        %559 = vmatpush.bf16.msra.mxu0 %v542
        %560 = vmatpush.bf16.msra.mxu0 %v541
        %561 = vmatpush.bf16.msra.mxu0 %v540
        %562 = vmatpush.bf16.msra.mxu0 %v539
        %563 = vmatmul.bf16.gmra.mxu0 %v486
        %v564 = vpop.f32.mrf.mxu0
        %v565 = vadd.f32 %v505, %v564
        %v566 = vpop.f32.mrf.mxu0
        %567 = vdwg.mxu0
        %v568 = vadd.f32 %v565, %v344
        %569 = vst [vmem:[%s343] sm:$0xff] %v568
        %s570 = sand.u32 %s186, 1
        %s571 = scalar_lea.sflag [#allocation4], %s570
        %s572 = sand.u32 %s186, 1
        %s573 = smul.addr %s572, 8
        %s574 = scalar_lea.vmem [#allocation10], %s573
        // Predicated region
        $region65: #{tpu_custom_call.1} parent=47 // pred_check
          %p575 = pneg %p196
        $region66: #{tpu_custom_call.1} parent=47 // pred_check_branch
          %577 = sbr.rel (%p575) target = $region68
        $region67: #{tpu_custom_call.1} parent=47 // pred_region
          %579 = vsyncadd %s571, 0
          %s580 = smul.addr %s26, 8
          %s581 = scalar_lea.hbm %s7, %s580
          %s583 = sshll.u32 %s574, 4
          %s584 = int_to_ptr.vmem [resolvable:$true] %s583
          %s585 = sshll.u32 %s581, 4
          %s586 = int_to_ptr.hbm [resolvable:$true] %s585
          %588 = dma.vmem_to_hbm [thread:$0]  %s584, 128, %s586, %s571
        $region68: #{tpu_custom_call.1} parent=47 // pred_fallthru
          _
      $region48: #{tpu_custom_call.1} parent=5 // pred_fallthru
        _
      %p589 = scmp.le.s32.totalorder 2, %s21
      // Predicated region
      $region69: #{tpu_custom_call.1} parent=5 // pred_check
        %p590 = pneg %p589
      $region70: #{tpu_custom_call.1} parent=5 // pred_check_branch
        %592 = sbr.rel (%p590) target = $region72
      $region71: #{tpu_custom_call.1} parent=5 // pred_region
        %s593 = ssub.s32 %s21, 2
        // Predicated region
        $region73: #{tpu_custom_call.1} parent=71 // pred_check
          %p594 = pneg %p202
        $region74: #{tpu_custom_call.1} parent=71 // pred_check_branch
          %596 = sbr.rel (%p594) target = $region76
        $region75: #{tpu_custom_call.1} parent=71 // pred_region
          %s597 = sand.u32 %s187, 1
          %s598 = scalar_lea.sflag [#allocation4], %s597
          %s599 = sand.u32 %s187, 1
          %s600 = smul.addr %s599, 8
          %s601 = scalar_lea.vmem [#allocation10], %s600
          %603 = dma.done %s598, 128
        $region76: #{tpu_custom_call.1} parent=71 // pred_fallthru
          _
      $region72: #{tpu_custom_call.1} parent=5 // pred_fallthru
        _
    $region6: #{tpu_custom_call.1} parent=1 // loop_footer
      %s25 = sadd.s32 1, %s21
    $region7: #{tpu_custom_call.1} parent=1 // loop_footer_branch
      %20 = sbr.rel target = $region3
    $region8: #{tpu_custom_call.1} parent=1 // loop_exit
      _
    %604 = vsyncpa [#allocation3], 1
    %s605 = scalar_lea.sflag [#allocation3], 1
    %606 = vsyncpa %s605, 1
    %607 = vsyncpa [#allocation6], 1
    %608 = vsyncpa [#allocation9], 1
    %609 = vsyncpa [#allocation4], 1
    %s610 = scalar_lea.sflag [#allocation4], 1
    %611 = vsyncpa %s610, 1

</llo_original>
